<compile_context>
chip_gen: v6e
topology: v6e:2x2x1
jax: 0.10.0
libtpu: 0.0.40
codegen_flags: <defaults>
</compile_context>

<pallas_src>
import math
from functools import partial

import jax
import jax.numpy as jnp
from jax.experimental import pallas as pl
from jax.experimental.pallas import tpu as pltpu

LEAKY_RATE = 0.1


# ----------------------------- Pallas kernel ------------------------------- #
def make_pointconv_kernel(nsample, cf, wnet, cout, neg_slope, cf_chunk):
    """Kernel for one (batch, npoint-tile) grid point.

    feat_ref : [1, S, CF, TP]  bf16 (CF = 3 + C; xyz offsets are channels 0:3,
                               npoint tile on lanes)
    o_ref    : [1, cout, TP]   f32
    wt_ref   : [S, W, TP]      f32 VMEM scratch (cached WeightNet outputs)
    """

    def kernel(feat_ref, w1_ref, b1_ref, w2_ref, b2_ref, w3_ref, b3_ref,
               wlin_ref, blin_ref, o_ref, wt_ref):
        tp = o_ref.shape[-1]

        # ------------------------------------------------------------------
        # WeightNet (1x1-conv MLP 3 -> h1 -> h2 -> W, ReLU after each layer),
        # evaluated for ALL nsample neighbours at once as VPU broadcast-FMA
        # chains: keeps the MXU free for the big Linear dot below.  Bias
        # broadcasts are emitted exactly once (no per-sample re-broadcast).
        # ------------------------------------------------------------------
        xyz = feat_ref[0, :, 0:3, :].astype(jnp.float32)            # [S, 3, TP]

        w1, b1 = w1_ref[...], b1_ref[...]                           # [h1,3],[h1,1]
        w2, b2 = w2_ref[...], b2_ref[...]                           # [h2,h1],[h2,1]
        w3, b3 = w3_ref[...], b3_ref[...]                           # [W,h2],[W,1]
        h1n, h2n = w1.shape[0], w2.shape[0]

        h = jnp.broadcast_to(b1[None, :, :], (nsample, h1n, tp)).astype(jnp.float32)
        for c in range(3):
            h = h + w1[None, :, c:c + 1] * xyz[:, c:c + 1, :]       # [S, h1, TP]
        h = jnp.maximum(h, 0.0)

        g = jnp.broadcast_to(b2[None, :, :], (nsample, h2n, tp)).astype(jnp.float32)
        for i in range(h1n):
            g = g + w2[None, :, i:i + 1] * h[:, i:i + 1, :]         # [S, h2, TP]
        g = jnp.maximum(g, 0.0)

        wt = jnp.broadcast_to(b3[None, :, :], (nsample, wnet, tp)).astype(jnp.float32)
        for i in range(h2n):
            wt = wt + w3[None, :, i:i + 1] * g[:, i:i + 1, :]       # [S, W, TP]
        wt = jnp.maximum(wt, 0.0)

        wt_ref[...] = wt          # cache for reuse by every CF chunk below

        # ------------------------------------------------------------------
        # Chunked PointConv accumulation:
        #   pm[c, w, p]   = sum_s feats[c, s, p] * wt[s, w, p]      (VPU rank-1)
        #   out[o, p]    += wlin[o, c*W + w] * pm[c, w, p]          (MXU, per chunk)
        # Chunking CF keeps the live pm accumulator <= ~32 f32 vregs, while the
        # total MXU work is identical to one [cout, CF*W] @ [CF*W, TP] dot.
        # Flatten order (c major, w minor) matches torch's .view(B, npoint, C*W).
        # ------------------------------------------------------------------
        out = jnp.broadcast_to(blin_ref[...], (cout, tp)).astype(jnp.float32)
        for c0 in range(0, cf, cf_chunk):
            c1 = min(c0 + cf_chunk, cf)
            csz = c1 - c0
            pm = jnp.zeros((csz, wnet, tp), jnp.float32)
            for s in range(nsample):
                fs = feat_ref[0, s, c0:c1, :].astype(jnp.float32)   # [csz, TP]
                pm = pm + fs[:, None, :] * wt_ref[s][None, :, :]    # [csz, W, TP]
            pm2 = pm.reshape(csz * wnet, tp)                        # [csz*W, TP]
            out = out + jnp.dot(wlin_ref[:, c0 * wnet:c1 * wnet], pm2,
                                preferred_element_type=jnp.float32)  # f32 Linear

        # LeakyReLU(0.1)
        out = jnp.where(out > 0, out, neg_slope * out)
        o_ref[0] = out.astype(o_ref.dtype)

    return kernel


def pointconv_pallas(feats_t, params, wnet, cout, *, tile_p=256):
    """feats_t: [B, S, CF, P] (npoint on the minor/lane dim). Returns [B, cout, P]."""
    B, S, CF, P = feats_t.shape
    w1, b1, w2, b2, w3, b3, wlin, blin = params

    # Lane-dense padding: pad npoint to a multiple of 128 so output stores are
    # unmasked, then pick the widest tile <= tile_p that divides it.
    P_pad = max(128, ((P + 127) // 128) * 128)
    if P_pad != P:
        feats_t = jnp.pad(feats_t, ((0, 0), (0, 0), (0, 0), (0, P_pad - P)))
    TP = max(128, min(tile_p, P_pad))
    while P_pad % TP:
        TP -= 128

    # Channel chunk so the live [csz, W, TP] f32 rank-1 accumulator stays ~<=32
    # vregs (32 vregs * 1024 f32 each); round to a multiple of 8 so the wlin
    # column slices stay 128-aligned when W is a multiple of 8.
    cf_chunk = max(1, (32 * 1024) // (wnet * TP))
    if cf_chunk >= 8:
        cf_chunk = (cf_chunk // 8) * 8
    cf_chunk = min(cf_chunk, CF)

    kernel = make_pointconv_kernel(S, CF, wnet, cout, LEAKY_RATE, cf_chunk)

    def rep_spec(a):
        nd = a.ndim
        return pl.BlockSpec(a.shape, lambda b, p, _nd=nd: (0,) * _nd)

    out = pl.pallas_call(
        kernel,
        out_shape=jax.ShapeDtypeStruct((B, cout, P_pad), jnp.float32),
        grid=(B, P_pad // TP),
        in_specs=[
            pl.BlockSpec((1, S, CF, TP), lambda b, p: (b, 0, 0, p)),
            rep_spec(w1), rep_spec(b1), rep_spec(w2), rep_spec(b2),
            rep_spec(w3), rep_spec(b3), rep_spec(wlin), rep_spec(blin),
        ],
        out_specs=pl.BlockSpec((1, cout, TP), lambda b, p: (b, 0, p)),
        scratch_shapes=[pltpu.VMEM((S, wnet, TP), jnp.float32)],
        compiler_params=pltpu.CompilerParams(
            dimension_semantics=("parallel", "parallel"),
            vmem_limit_bytes=32 * 1024 * 1024),
    )(feats_t, w1, b1, w2, b2, w3, b3, wlin, blin)

    return out[:, :, :P]


# --------------------------- plain-JAX glue ops ----------------------------- #
# TODO(synk): furthest_point_sample / kNN grouping are data-dependent gathers;
# implemented as plain-JAX glue rather than inside the Pallas kernel.
def furthest_point_sample(xyz_c, npoint):
    # xyz_c: [B, 3, N] -> [B, npoint] int32.
    # TODO(synk): deterministic start at index 0; torch CUDA FPS starts at a
    # random index, so sampled sets match in distribution, not bit-for-bit.
    B, _, N = xyz_c.shape

    def body(i, state):
        idxs, dist, farthest = state
        idxs = idxs.at[:, i].set(farthest)
        centroid = jnp.take_along_axis(xyz_c, farthest[:, None, None], axis=2)  # [B,3,1]
        d = jnp.sum((xyz_c - centroid) ** 2, axis=1)                            # [B,N]
        dist = jnp.minimum(dist, d)
        farthest = jnp.argmax(dist, axis=-1).astype(jnp.int32)
        return idxs, dist, farthest

    init = (jnp.zeros((B, npoint), jnp.int32),
            jnp.full((B, N), 1e10, jnp.float32),
            jnp.zeros((B,), jnp.int32))
    idxs, _, _ = jax.lax.fori_loop(0, npoint, body, init)
    return idxs


def pointconvd_forward(xyz_c, points_c, params, *, npoint, nsample, wnet, cout,
                       feats_dtype=jnp.bfloat16):
    """xyz_c: [B,3,N], points_c: [B,C,N] (channel-first, as the torch module gets them)."""
    fps_idx = furthest_point_sample(xyz_c, npoint)                        # [B, P]
    new_xyz_c = jnp.take_along_axis(xyz_c, fps_idx[:, None, :], axis=2)   # [B, 3, P]

    # kNN directly in channel-first layout.
    d = jnp.sum((new_xyz_c[:, :, :, None] - xyz_c[:, :, None, :]) ** 2, axis=1)  # [B,P,N]
    _, idx = jax.lax.top_k(-d, nsample)                                   # [B, P, S]
    idx_t = jnp.transpose(idx, (0, 2, 1))                                 # [B, S, P]

    # Gather straight into the kernel layout [B, S, C, P] from channel-first
    # sources: no standalone transpose of the big grouped tensor.
    def group(src_c):  # [B, C, N] -> [B, S, C, P]
        return jnp.take_along_axis(src_c[:, None, :, :], idx_t[:, :, None, :], axis=3)

    grouped_xyz_norm = group(xyz_c) - new_xyz_c[:, None, :, :]            # [B, S, 3, P]
    grouped_points = group(points_c)                                      # [B, S, C, P]
    feats_t = jnp.concatenate([grouped_xyz_norm, grouped_points], axis=2) # [B, S, CF, P]
    # bf16 feats halve HBM traffic; all in-kernel accumulation stays f32.
    feats_t = feats_t.astype(feats_dtype)

    out = pointconv_pallas(feats_t, params, wnet, cout)                   # [B, cout, P]

    # TODO(synk): bn_linear (BatchNorm1d) path not implemented; module default use_bn=False.
    return (new_xyz_c,   # [B, 3, npoint]
            out,         # [B, cout, npoint]
            fps_idx)     # [B, npoint]


# ------------------------------ parameters ---------------------------------- #
def init_params(key, cin, wnet, cout, hidden=(8, 8)):
    ks = jax.random.split(key, 8)

    def u(k, shape, fan_in):
        bound = 1.0 / math.sqrt(fan_in)
        return jax.random.uniform(k, shape, jnp.float32, -bound, bound)

    h1, h2 = hidden
    # WeightNet 1x1-conv weights stored as [out, in] (matches Conv2d weight layout).
    w1 = u(ks[0], (h1, 3), 3)
    b1 = u(ks[1], (h1, 1), 3)
    w2 = u(ks[2], (h2, h1), h1)
    b2 = u(ks[3], (h2, 1), h1)
    w3 = u(ks[4], (wnet, h2), h2)
    b3 = u(ks[5], (wnet, 1), h2)
    # nn.Linear(wnet*cin, cout): weight [cout, cin*wnet] with K index = c*wnet + w
    # (same flatten order as torch's .view(B, npoint, C*W)); bias [cout, 1].
    wlin = u(ks[6], (cout, cin * wnet), cin * wnet)
    blin = u(ks[7], (cout, 1), cin * wnet)
    return (w1, b1, w2, b2, w3, b3, wlin, blin)


# --------------------------------- main -------------------------------------- #
if __name__ == "__main__":
    B, N, C_feat = 2, 16, 4
    npoint, nsample = 8, 8
    in_channel = C_feat + 3          # features fed to PointConvD include xyz offsets
    out_channel = 32
    weightnet = 16

    key = jax.random.PRNGKey(0)
    k_xyz, k_pts, k_par = jax.random.split(key, 3)
    xyz = jax.random.normal(k_xyz, (B, 3, N), jnp.float32)          # [B,3,N]
    points = jax.random.normal(k_pts, (B, C_feat, N), jnp.float32)  # [B,C,N]
    params = init_params(k_par, in_channel, weightnet, out_channel)

    fwd = jax.jit(partial(pointconvd_forward,
                          npoint=npoint, nsample=nsample,
                          wnet=weightnet, cout=out_channel))
    new_xyz, new_points, fps_idx = fwd(xyz, points, params)
    jax.block_until_ready((new_xyz, new_points, fps_idx))

    assert new_xyz.shape == (B, 3, npoint)
    assert new_points.shape == (B, out_channel, npoint)
    assert fps_idx.shape == (B, npoint)
    print("KERNEL_OK")
</pallas_src>

<mosaic_0001>
module attributes {stable_mosaic.version = 11 : i64} {
  func.func @kernel(%arg0: i32, %arg1: i32, %arg2: memref<1x8x7x128xbf16, #tpu.memory_space<vmem>>, %arg3: memref<8x3xf32, #tpu.memory_space<vmem>>, %arg4: memref<8x1xf32, #tpu.memory_space<vmem>>, %arg5: memref<8x8xf32, #tpu.memory_space<vmem>>, %arg6: memref<8x1xf32, #tpu.memory_space<vmem>>, %arg7: memref<16x8xf32, #tpu.memory_space<vmem>>, %arg8: memref<16x1xf32, #tpu.memory_space<vmem>>, %arg9: memref<32x112xf32, #tpu.memory_space<vmem>>, %arg10: memref<32x1xf32, #tpu.memory_space<vmem>>, %arg11: memref<1x32x128xf32, #tpu.memory_space<vmem>>, %arg12: memref<8x16x128xf32, #tpu.memory_space<vmem>>) attributes {dimension_semantics = [#tpu.dimension_semantics<parallel>, #tpu.dimension_semantics<parallel>], iteration_bounds = array<i64: 2, 1>, scalar_prefetch = 0 : i64, scratch_operands = 1 : i64, tpu.core_type = #tpu.core_type<tc>, window_params = [{transform_indices = @transform_0, window_bounds = array<i64: 1, 8, 7, 128>}, {pipeline_mode = #tpu.pipeline_mode<synchronous>, transform_indices = @transform_1, window_bounds = array<i64: 8, 3>}, {pipeline_mode = #tpu.pipeline_mode<synchronous>, transform_indices = @transform_2, window_bounds = array<i64: 8, 1>}, {pipeline_mode = #tpu.pipeline_mode<synchronous>, transform_indices = @transform_3, window_bounds = array<i64: 8, 8>}, {pipeline_mode = #tpu.pipeline_mode<synchronous>, transform_indices = @transform_4, window_bounds = array<i64: 8, 1>}, {pipeline_mode = #tpu.pipeline_mode<synchronous>, transform_indices = @transform_5, window_bounds = array<i64: 16, 8>}, {pipeline_mode = #tpu.pipeline_mode<synchronous>, transform_indices = @transform_6, window_bounds = array<i64: 16, 1>}, {pipeline_mode = #tpu.pipeline_mode<synchronous>, transform_indices = @transform_7, window_bounds = array<i64: 32, 112>}, {pipeline_mode = #tpu.pipeline_mode<synchronous>, transform_indices = @transform_8, window_bounds = array<i64: 32, 1>}, {transform_indices = @transform_9, window_bounds = array<i64: 1, 32, 128>}]} {
    %c0 = arith.constant 0 : index
    %c0_0 = arith.constant 0 : index
    %c0_1 = arith.constant 0 : index
    %c0_2 = arith.constant 0 : index
    %0 = vector.load %arg2[%c0, %c0_0, %c0_1, %c0_2] : memref<1x8x7x128xbf16, #tpu.memory_space<vmem>>, vector<1x8x3x128xbf16>
    %1 = vector.shape_cast %0 : vector<1x8x3x128xbf16> to vector<8x3x128xbf16>
    %2 = arith.extf %1 : vector<8x3x128xbf16> to vector<8x3x128xf32>
    %c0_3 = arith.constant 0 : index
    %c0_4 = arith.constant 0 : index
    %3 = vector.load %arg3[%c0_3, %c0_4] : memref<8x3xf32, #tpu.memory_space<vmem>>, vector<8x3xf32>
    %c0_5 = arith.constant 0 : index
    %c0_6 = arith.constant 0 : index
    %4 = vector.load %arg4[%c0_5, %c0_6] : memref<8x1xf32, #tpu.memory_space<vmem>>, vector<8x1xf32>
    %c0_7 = arith.constant 0 : index
    %c0_8 = arith.constant 0 : index
    %5 = vector.load %arg5[%c0_7, %c0_8] : memref<8x8xf32, #tpu.memory_space<vmem>>, vector<8x8xf32>
    %c0_9 = arith.constant 0 : index
    %c0_10 = arith.constant 0 : index
    %6 = vector.load %arg6[%c0_9, %c0_10] : memref<8x1xf32, #tpu.memory_space<vmem>>, vector<8x1xf32>
    %c0_11 = arith.constant 0 : index
    %c0_12 = arith.constant 0 : index
    %7 = vector.load %arg7[%c0_11, %c0_12] : memref<16x8xf32, #tpu.memory_space<vmem>>, vector<16x8xf32>
    %c0_13 = arith.constant 0 : index
    %c0_14 = arith.constant 0 : index
    %8 = vector.load %arg8[%c0_13, %c0_14] : memref<16x1xf32, #tpu.memory_space<vmem>>, vector<16x1xf32>
    %9 = vector.shape_cast %4 : vector<8x1xf32> to vector<1x8x1xf32>
    %10 = vector.shape_cast %9 : vector<1x8x1xf32> to vector<1x8x1xf32>
    %11 = vector.broadcast %10 : vector<1x8x1xf32> to vector<8x8x128xf32>
    %12 = vector.extract_strided_slice %3 {offsets = [0, 0], sizes = [8, 1], strides = [1, 1]} : vector<8x3xf32> to vector<8x1xf32>
    %13 = vector.shape_cast %12 : vector<8x1xf32> to vector<1x8x1xf32>
    %14 = vector.extract_strided_slice %2 {offsets = [0, 0, 0], sizes = [8, 1, 128], strides = [1, 1, 1]} : vector<8x3x128xf32> to vector<8x1x128xf32>
    %15 = vector.broadcast %13 : vector<1x8x1xf32> to vector<8x8x128xf32>
    %16 = vector.broadcast %14 : vector<8x1x128xf32> to vector<8x8x128xf32>
    %17 = arith.mulf %15, %16 : vector<8x8x128xf32>
    %18 = arith.addf %11, %17 : vector<8x8x128xf32>
    %19 = vector.extract_strided_slice %3 {offsets = [0, 1], sizes = [8, 1], strides = [1, 1]} : vector<8x3xf32> to vector<8x1xf32>
    %20 = vector.shape_cast %19 : vector<8x1xf32> to vector<1x8x1xf32>
    %21 = vector.extract_strided_slice %2 {offsets = [0, 1, 0], sizes = [8, 1, 128], strides = [1, 1, 1]} : vector<8x3x128xf32> to vector<8x1x128xf32>
    %22 = vector.broadcast %20 : vector<1x8x1xf32> to vector<8x8x128xf32>
    %23 = vector.broadcast %21 : vector<8x1x128xf32> to vector<8x8x128xf32>
    %24 = arith.mulf %22, %23 : vector<8x8x128xf32>
    %25 = arith.addf %18, %24 : vector<8x8x128xf32>
    %26 = vector.extract_strided_slice %3 {offsets = [0, 2], sizes = [8, 1], strides = [1, 1]} : vector<8x3xf32> to vector<8x1xf32>
    %27 = vector.shape_cast %26 : vector<8x1xf32> to vector<1x8x1xf32>
    %28 = vector.extract_strided_slice %2 {offsets = [0, 2, 0], sizes = [8, 1, 128], strides = [1, 1, 1]} : vector<8x3x128xf32> to vector<8x1x128xf32>
    %29 = vector.broadcast %27 : vector<1x8x1xf32> to vector<8x8x128xf32>
    %30 = vector.broadcast %28 : vector<8x1x128xf32> to vector<8x8x128xf32>
    %31 = arith.mulf %29, %30 : vector<8x8x128xf32>
    %32 = arith.addf %25, %31 : vector<8x8x128xf32>
    %cst = arith.constant 0.000000e+00 : f32
    %33 = vector.broadcast %cst : f32 to vector<8x8x128xf32>
    %34 = arith.maximumf %32, %33 : vector<8x8x128xf32>
    %35 = vector.shape_cast %6 : vector<8x1xf32> to vector<1x8x1xf32>
    %36 = vector.shape_cast %35 : vector<1x8x1xf32> to vector<1x8x1xf32>
    %37 = vector.broadcast %36 : vector<1x8x1xf32> to vector<8x8x128xf32>
    %38 = vector.extract_strided_slice %5 {offsets = [0, 0], sizes = [8, 1], strides = [1, 1]} : vector<8x8xf32> to vector<8x1xf32>
    %39 = vector.shape_cast %38 : vector<8x1xf32> to vector<1x8x1xf32>
    %40 = vector.extract_strided_slice %34 {offsets = [0, 0, 0], sizes = [8, 1, 128], strides = [1, 1, 1]} : vector<8x8x128xf32> to vector<8x1x128xf32>
    %41 = vector.broadcast %39 : vector<1x8x1xf32> to vector<8x8x128xf32>
    %42 = vector.broadcast %40 : vector<8x1x128xf32> to vector<8x8x128xf32>
    %43 = arith.mulf %41, %42 : vector<8x8x128xf32>
    %44 = arith.addf %37, %43 : vector<8x8x128xf32>
    %45 = vector.extract_strided_slice %5 {offsets = [0, 1], sizes = [8, 1], strides = [1, 1]} : vector<8x8xf32> to vector<8x1xf32>
    %46 = vector.shape_cast %45 : vector<8x1xf32> to vector<1x8x1xf32>
    %47 = vector.extract_strided_slice %34 {offsets = [0, 1, 0], sizes = [8, 1, 128], strides = [1, 1, 1]} : vector<8x8x128xf32> to vector<8x1x128xf32>
    %48 = vector.broadcast %46 : vector<1x8x1xf32> to vector<8x8x128xf32>
    %49 = vector.broadcast %47 : vector<8x1x128xf32> to vector<8x8x128xf32>
    %50 = arith.mulf %48, %49 : vector<8x8x128xf32>
    %51 = arith.addf %44, %50 : vector<8x8x128xf32>
    %52 = vector.extract_strided_slice %5 {offsets = [0, 2], sizes = [8, 1], strides = [1, 1]} : vector<8x8xf32> to vector<8x1xf32>
    %53 = vector.shape_cast %52 : vector<8x1xf32> to vector<1x8x1xf32>
    %54 = vector.extract_strided_slice %34 {offsets = [0, 2, 0], sizes = [8, 1, 128], strides = [1, 1, 1]} : vector<8x8x128xf32> to vector<8x1x128xf32>
    %55 = vector.broadcast %53 : vector<1x8x1xf32> to vector<8x8x128xf32>
    %56 = vector.broadcast %54 : vector<8x1x128xf32> to vector<8x8x128xf32>
    %57 = arith.mulf %55, %56 : vector<8x8x128xf32>
    %58 = arith.addf %51, %57 : vector<8x8x128xf32>
    %59 = vector.extract_strided_slice %5 {offsets = [0, 3], sizes = [8, 1], strides = [1, 1]} : vector<8x8xf32> to vector<8x1xf32>
    %60 = vector.shape_cast %59 : vector<8x1xf32> to vector<1x8x1xf32>
    %61 = vector.extract_strided_slice %34 {offsets = [0, 3, 0], sizes = [8, 1, 128], strides = [1, 1, 1]} : vector<8x8x128xf32> to vector<8x1x128xf32>
    %62 = vector.broadcast %60 : vector<1x8x1xf32> to vector<8x8x128xf32>
    %63 = vector.broadcast %61 : vector<8x1x128xf32> to vector<8x8x128xf32>
    %64 = arith.mulf %62, %63 : vector<8x8x128xf32>
    %65 = arith.addf %58, %64 : vector<8x8x128xf32>
    %66 = vector.extract_strided_slice %5 {offsets = [0, 4], sizes = [8, 1], strides = [1, 1]} : vector<8x8xf32> to vector<8x1xf32>
    %67 = vector.shape_cast %66 : vector<8x1xf32> to vector<1x8x1xf32>
    %68 = vector.extract_strided_slice %34 {offsets = [0, 4, 0], sizes = [8, 1, 128], strides = [1, 1, 1]} : vector<8x8x128xf32> to vector<8x1x128xf32>
    %69 = vector.broadcast %67 : vector<1x8x1xf32> to vector<8x8x128xf32>
    %70 = vector.broadcast %68 : vector<8x1x128xf32> to vector<8x8x128xf32>
    %71 = arith.mulf %69, %70 : vector<8x8x128xf32>
    %72 = arith.addf %65, %71 : vector<8x8x128xf32>
    %73 = vector.extract_strided_slice %5 {offsets = [0, 5], sizes = [8, 1], strides = [1, 1]} : vector<8x8xf32> to vector<8x1xf32>
    %74 = vector.shape_cast %73 : vector<8x1xf32> to vector<1x8x1xf32>
    %75 = vector.extract_strided_slice %34 {offsets = [0, 5, 0], sizes = [8, 1, 128], strides = [1, 1, 1]} : vector<8x8x128xf32> to vector<8x1x128xf32>
    %76 = vector.broadcast %74 : vector<1x8x1xf32> to vector<8x8x128xf32>
    %77 = vector.broadcast %75 : vector<8x1x128xf32> to vector<8x8x128xf32>
    %78 = arith.mulf %76, %77 : vector<8x8x128xf32>
    %79 = arith.addf %72, %78 : vector<8x8x128xf32>
    %80 = vector.extract_strided_slice %5 {offsets = [0, 6], sizes = [8, 1], strides = [1, 1]} : vector<8x8xf32> to vector<8x1xf32>
    %81 = vector.shape_cast %80 : vector<8x1xf32> to vector<1x8x1xf32>
    %82 = vector.extract_strided_slice %34 {offsets = [0, 6, 0], sizes = [8, 1, 128], strides = [1, 1, 1]} : vector<8x8x128xf32> to vector<8x1x128xf32>
    %83 = vector.broadcast %81 : vector<1x8x1xf32> to vector<8x8x128xf32>
    %84 = vector.broadcast %82 : vector<8x1x128xf32> to vector<8x8x128xf32>
    %85 = arith.mulf %83, %84 : vector<8x8x128xf32>
    %86 = arith.addf %79, %85 : vector<8x8x128xf32>
    %87 = vector.extract_strided_slice %5 {offsets = [0, 7], sizes = [8, 1], strides = [1, 1]} : vector<8x8xf32> to vector<8x1xf32>
    %88 = vector.shape_cast %87 : vector<8x1xf32> to vector<1x8x1xf32>
    %89 = vector.extract_strided_slice %34 {offsets = [0, 7, 0], sizes = [8, 1, 128], strides = [1, 1, 1]} : vector<8x8x128xf32> to vector<8x1x128xf32>
    %90 = vector.broadcast %88 : vector<1x8x1xf32> to vector<8x8x128xf32>
    %91 = vector.broadcast %89 : vector<8x1x128xf32> to vector<8x8x128xf32>
    %92 = arith.mulf %90, %91 : vector<8x8x128xf32>
    %93 = arith.addf %86, %92 : vector<8x8x128xf32>
    %cst_15 = arith.constant 0.000000e+00 : f32
    %94 = vector.broadcast %cst_15 : f32 to vector<8x8x128xf32>
    %95 = arith.maximumf %93, %94 : vector<8x8x128xf32>
    %96 = vector.shape_cast %8 : vector<16x1xf32> to vector<1x16x1xf32>
    %97 = vector.shape_cast %96 : vector<1x16x1xf32> to vector<1x16x1xf32>
    %98 = vector.broadcast %97 : vector<1x16x1xf32> to vector<8x16x128xf32>
    %99 = vector.extract_strided_slice %7 {offsets = [0, 0], sizes = [16, 1], strides = [1, 1]} : vector<16x8xf32> to vector<16x1xf32>
    %100 = vector.shape_cast %99 : vector<16x1xf32> to vector<1x16x1xf32>
    %101 = vector.extract_strided_slice %95 {offsets = [0, 0, 0], sizes = [8, 1, 128], strides = [1, 1, 1]} : vector<8x8x128xf32> to vector<8x1x128xf32>
    %102 = vector.broadcast %100 : vector<1x16x1xf32> to vector<8x16x128xf32>
    %103 = vector.broadcast %101 : vector<8x1x128xf32> to vector<8x16x128xf32>
    %104 = arith.mulf %102, %103 : vector<8x16x128xf32>
    %105 = arith.addf %98, %104 : vector<8x16x128xf32>
    %106 = vector.extract_strided_slice %7 {offsets = [0, 1], sizes = [16, 1], strides = [1, 1]} : vector<16x8xf32> to vector<16x1xf32>
    %107 = vector.shape_cast %106 : vector<16x1xf32> to vector<1x16x1xf32>
    %108 = vector.extract_strided_slice %95 {offsets = [0, 1, 0], sizes = [8, 1, 128], strides = [1, 1, 1]} : vector<8x8x128xf32> to vector<8x1x128xf32>
    %109 = vector.broadcast %107 : vector<1x16x1xf32> to vector<8x16x128xf32>
    %110 = vector.broadcast %108 : vector<8x1x128xf32> to vector<8x16x128xf32>
    %111 = arith.mulf %109, %110 : vector<8x16x128xf32>
    %112 = arith.addf %105, %111 : vector<8x16x128xf32>
    %113 = vector.extract_strided_slice %7 {offsets = [0, 2], sizes = [16, 1], strides = [1, 1]} : vector<16x8xf32> to vector<16x1xf32>
    %114 = vector.shape_cast %113 : vector<16x1xf32> to vector<1x16x1xf32>
    %115 = vector.extract_strided_slice %95 {offsets = [0, 2, 0], sizes = [8, 1, 128], strides = [1, 1, 1]} : vector<8x8x128xf32> to vector<8x1x128xf32>
    %116 = vector.broadcast %114 : vector<1x16x1xf32> to vector<8x16x128xf32>
    %117 = vector.broadcast %115 : vector<8x1x128xf32> to vector<8x16x128xf32>
    %118 = arith.mulf %116, %117 : vector<8x16x128xf32>
    %119 = arith.addf %112, %118 : vector<8x16x128xf32>
    %120 = vector.extract_strided_slice %7 {offsets = [0, 3], sizes = [16, 1], strides = [1, 1]} : vector<16x8xf32> to vector<16x1xf32>
    %121 = vector.shape_cast %120 : vector<16x1xf32> to vector<1x16x1xf32>
    %122 = vector.extract_strided_slice %95 {offsets = [0, 3, 0], sizes = [8, 1, 128], strides = [1, 1, 1]} : vector<8x8x128xf32> to vector<8x1x128xf32>
    %123 = vector.broadcast %121 : vector<1x16x1xf32> to vector<8x16x128xf32>
    %124 = vector.broadcast %122 : vector<8x1x128xf32> to vector<8x16x128xf32>
    %125 = arith.mulf %123, %124 : vector<8x16x128xf32>
    %126 = arith.addf %119, %125 : vector<8x16x128xf32>
    %127 = vector.extract_strided_slice %7 {offsets = [0, 4], sizes = [16, 1], strides = [1, 1]} : vector<16x8xf32> to vector<16x1xf32>
    %128 = vector.shape_cast %127 : vector<16x1xf32> to vector<1x16x1xf32>
    %129 = vector.extract_strided_slice %95 {offsets = [0, 4, 0], sizes = [8, 1, 128], strides = [1, 1, 1]} : vector<8x8x128xf32> to vector<8x1x128xf32>
    %130 = vector.broadcast %128 : vector<1x16x1xf32> to vector<8x16x128xf32>
    %131 = vector.broadcast %129 : vector<8x1x128xf32> to vector<8x16x128xf32>
    %132 = arith.mulf %130, %131 : vector<8x16x128xf32>
    %133 = arith.addf %126, %132 : vector<8x16x128xf32>
    %134 = vector.extract_strided_slice %7 {offsets = [0, 5], sizes = [16, 1], strides = [1, 1]} : vector<16x8xf32> to vector<16x1xf32>
    %135 = vector.shape_cast %134 : vector<16x1xf32> to vector<1x16x1xf32>
    %136 = vector.extract_strided_slice %95 {offsets = [0, 5, 0], sizes = [8, 1, 128], strides = [1, 1, 1]} : vector<8x8x128xf32> to vector<8x1x128xf32>
    %137 = vector.broadcast %135 : vector<1x16x1xf32> to vector<8x16x128xf32>
    %138 = vector.broadcast %136 : vector<8x1x128xf32> to vector<8x16x128xf32>
    %139 = arith.mulf %137, %138 : vector<8x16x128xf32>
    %140 = arith.addf %133, %139 : vector<8x16x128xf32>
    %141 = vector.extract_strided_slice %7 {offsets = [0, 6], sizes = [16, 1], strides = [1, 1]} : vector<16x8xf32> to vector<16x1xf32>
    %142 = vector.shape_cast %141 : vector<16x1xf32> to vector<1x16x1xf32>
    %143 = vector.extract_strided_slice %95 {offsets = [0, 6, 0], sizes = [8, 1, 128], strides = [1, 1, 1]} : vector<8x8x128xf32> to vector<8x1x128xf32>
    %144 = vector.broadcast %142 : vector<1x16x1xf32> to vector<8x16x128xf32>
    %145 = vector.broadcast %143 : vector<8x1x128xf32> to vector<8x16x128xf32>
    %146 = arith.mulf %144, %145 : vector<8x16x128xf32>
    %147 = arith.addf %140, %146 : vector<8x16x128xf32>
    %148 = vector.extract_strided_slice %7 {offsets = [0, 7], sizes = [16, 1], strides = [1, 1]} : vector<16x8xf32> to vector<16x1xf32>
    %149 = vector.shape_cast %148 : vector<16x1xf32> to vector<1x16x1xf32>
    %150 = vector.extract_strided_slice %95 {offsets = [0, 7, 0], sizes = [8, 1, 128], strides = [1, 1, 1]} : vector<8x8x128xf32> to vector<8x1x128xf32>
    %151 = vector.broadcast %149 : vector<1x16x1xf32> to vector<8x16x128xf32>
    %152 = vector.broadcast %150 : vector<8x1x128xf32> to vector<8x16x128xf32>
    %153 = arith.mulf %151, %152 : vector<8x16x128xf32>
    %154 = arith.addf %147, %153 : vector<8x16x128xf32>
    %cst_16 = arith.constant 0.000000e+00 : f32
    %155 = vector.broadcast %cst_16 : f32 to vector<8x16x128xf32>
    %156 = arith.maximumf %154, %155 : vector<8x16x128xf32>
    %c0_17 = arith.constant 0 : index
    %c0_18 = arith.constant 0 : index
    %c0_19 = arith.constant 0 : index
    %157 = vector.load %arg12[%c0_17, %c0_18, %c0_19] : memref<8x16x128xf32, #tpu.memory_space<vmem>>, vector<8x16x128xf32>
    tpu.vector_store %arg12[%c0_17, %c0_18, %c0_19], %156 {strides = array<i32>} : memref<8x16x128xf32, #tpu.memory_space<vmem>>, vector<8x16x128xf32>,
    %c0_20 = arith.constant 0 : index
    %c0_21 = arith.constant 0 : index
    %158 = vector.load %arg10[%c0_20, %c0_21] : memref<32x1xf32, #tpu.memory_space<vmem>>, vector<32x1xf32>
    %159 = vector.shape_cast %158 : vector<32x1xf32> to vector<32x1xf32>
    %160 = vector.broadcast %159 : vector<32x1xf32> to vector<32x128xf32>
    %cst_22 = arith.constant 0.000000e+00 : f32
    %161 = vector.broadcast %cst_22 : f32 to vector<7x16x128xf32>
    %c0_23 = arith.constant 0 : index
    %c0_24 = arith.constant 0 : index
    %c0_25 = arith.constant 0 : index
    %c0_26 = arith.constant 0 : index
    %162 = vector.load %arg2[%c0_23, %c0_24, %c0_25, %c0_26] : memref<1x8x7x128xbf16, #tpu.memory_space<vmem>>, vector<1x1x7x128xbf16>
    %163 = vector.shape_cast %162 : vector<1x1x7x128xbf16> to vector<7x128xbf16>
    %164 = arith.extf %163 : vector<7x128xbf16> to vector<7x128xf32>
    %165 = vector.shape_cast %164 : vector<7x128xf32> to vector<7x1x128xf32>
    %c0_27 = arith.constant 0 : index
    %c0_28 = arith.constant 0 : index
    %c0_29 = arith.constant 0 : index
    %166 = vector.load %arg12[%c0_27, %c0_28, %c0_29] : memref<8x16x128xf32, #tpu.memory_space<vmem>>, vector<1x16x128xf32>
    %167 = vector.shape_cast %166 : vector<1x16x128xf32> to vector<16x128xf32>
    %168 = vector.shape_cast %167 : vector<16x128xf32> to vector<1x16x128xf32>
    %169 = vector.broadcast %165 : vector<7x1x128xf32> to vector<7x16x128xf32>
    %170 = vector.broadcast %168 : vector<1x16x128xf32> to vector<7x16x128xf32>
    %171 = arith.mulf %169, %170 : vector<7x16x128xf32>
    %172 = arith.addf %161, %171 : vector<7x16x128xf32>
    %c0_30 = arith.constant 0 : index
    %c1 = arith.constant 1 : index
    %c0_31 = arith.constant 0 : index
    %c0_32 = arith.constant 0 : index
    %173 = vector.load %arg2[%c0_30, %c1, %c0_31, %c0_32] : memref<1x8x7x128xbf16, #tpu.memory_space<vmem>>, vector<1x1x7x128xbf16>
    %174 = vector.shape_cast %173 : vector<1x1x7x128xbf16> to vector<7x128xbf16>
    %175 = arith.extf %174 : vector<7x128xbf16> to vector<7x128xf32>
    %176 = vector.shape_cast %175 : vector<7x128xf32> to vector<7x1x128xf32>
    %c1_33 = arith.constant 1 : index
    %c0_34 = arith.constant 0 : index
    %c0_35 = arith.constant 0 : index
    %177 = vector.load %arg12[%c1_33, %c0_34, %c0_35] : memref<8x16x128xf32, #tpu.memory_space<vmem>>, vector<1x16x128xf32>
    %178 = vector.shape_cast %177 : vector<1x16x128xf32> to vector<16x128xf32>
    %179 = vector.shape_cast %178 : vector<16x128xf32> to vector<1x16x128xf32>
    %180 = vector.broadcast %176 : vector<7x1x128xf32> to vector<7x16x128xf32>
    %181 = vector.broadcast %179 : vector<1x16x128xf32> to vector<7x16x128xf32>
    %182 = arith.mulf %180, %181 : vector<7x16x128xf32>
    %183 = arith.addf %172, %182 : vector<7x16x128xf32>
    %c0_36 = arith.constant 0 : index
    %c2 = arith.constant 2 : index
    %c0_37 = arith.constant 0 : index
    %c0_38 = arith.constant 0 : index
    %184 = vector.load %arg2[%c0_36, %c2, %c0_37, %c0_38] : memref<1x8x7x128xbf16, #tpu.memory_space<vmem>>, vector<1x1x7x128xbf16>
    %185 = vector.shape_cast %184 : vector<1x1x7x128xbf16> to vector<7x128xbf16>
    %186 = arith.extf %185 : vector<7x128xbf16> to vector<7x128xf32>
    %187 = vector.shape_cast %186 : vector<7x128xf32> to vector<7x1x128xf32>
    %c2_39 = arith.constant 2 : index
    %c0_40 = arith.constant 0 : index
    %c0_41 = arith.constant 0 : index
    %188 = vector.load %arg12[%c2_39, %c0_40, %c0_41] : memref<8x16x128xf32, #tpu.memory_space<vmem>>, vector<1x16x128xf32>
    %189 = vector.shape_cast %188 : vector<1x16x128xf32> to vector<16x128xf32>
    %190 = vector.shape_cast %189 : vector<16x128xf32> to vector<1x16x128xf32>
    %191 = vector.broadcast %187 : vector<7x1x128xf32> to vector<7x16x128xf32>
    %192 = vector.broadcast %190 : vector<1x16x128xf32> to vector<7x16x128xf32>
    %193 = arith.mulf %191, %192 : vector<7x16x128xf32>
    %194 = arith.addf %183, %193 : vector<7x16x128xf32>
    %c0_42 = arith.constant 0 : index
    %c3 = arith.constant 3 : index
    %c0_43 = arith.constant 0 : index
    %c0_44 = arith.constant 0 : index
    %195 = vector.load %arg2[%c0_42, %c3, %c0_43, %c0_44] : memref<1x8x7x128xbf16, #tpu.memory_space<vmem>>, vector<1x1x7x128xbf16>
    %196 = vector.shape_cast %195 : vector<1x1x7x128xbf16> to vector<7x128xbf16>
    %197 = arith.extf %196 : vector<7x128xbf16> to vector<7x128xf32>
    %198 = vector.shape_cast %197 : vector<7x128xf32> to vector<7x1x128xf32>
    %c3_45 = arith.constant 3 : index
    %c0_46 = arith.constant 0 : index
    %c0_47 = arith.constant 0 : index
    %199 = vector.load %arg12[%c3_45, %c0_46, %c0_47] : memref<8x16x128xf32, #tpu.memory_space<vmem>>, vector<1x16x128xf32>
    %200 = vector.shape_cast %199 : vector<1x16x128xf32> to vector<16x128xf32>
    %201 = vector.shape_cast %200 : vector<16x128xf32> to vector<1x16x128xf32>
    %202 = vector.broadcast %198 : vector<7x1x128xf32> to vector<7x16x128xf32>
    %203 = vector.broadcast %201 : vector<1x16x128xf32> to vector<7x16x128xf32>
    %204 = arith.mulf %202, %203 : vector<7x16x128xf32>
    %205 = arith.addf %194, %204 : vector<7x16x128xf32>
    %c0_48 = arith.constant 0 : index
    %c4 = arith.constant 4 : index
    %c0_49 = arith.constant 0 : index
    %c0_50 = arith.constant 0 : index
    %206 = vector.load %arg2[%c0_48, %c4, %c0_49, %c0_50] : memref<1x8x7x128xbf16, #tpu.memory_space<vmem>>, vector<1x1x7x128xbf16>
    %207 = vector.shape_cast %206 : vector<1x1x7x128xbf16> to vector<7x128xbf16>
    %208 = arith.extf %207 : vector<7x128xbf16> to vector<7x128xf32>
    %209 = vector.shape_cast %208 : vector<7x128xf32> to vector<7x1x128xf32>
    %c4_51 = arith.constant 4 : index
    %c0_52 = arith.constant 0 : index
    %c0_53 = arith.constant 0 : index
    %210 = vector.load %arg12[%c4_51, %c0_52, %c0_53] : memref<8x16x128xf32, #tpu.memory_space<vmem>>, vector<1x16x128xf32>
    %211 = vector.shape_cast %210 : vector<1x16x128xf32> to vector<16x128xf32>
    %212 = vector.shape_cast %211 : vector<16x128xf32> to vector<1x16x128xf32>
    %213 = vector.broadcast %209 : vector<7x1x128xf32> to vector<7x16x128xf32>
    %214 = vector.broadcast %212 : vector<1x16x128xf32> to vector<7x16x128xf32>
    %215 = arith.mulf %213, %214 : vector<7x16x128xf32>
    %216 = arith.addf %205, %215 : vector<7x16x128xf32>
    %c0_54 = arith.constant 0 : index
    %c5 = arith.constant 5 : index
    %c0_55 = arith.constant 0 : index
    %c0_56 = arith.constant 0 : index
    %217 = vector.load %arg2[%c0_54, %c5, %c0_55, %c0_56] : memref<1x8x7x128xbf16, #tpu.memory_space<vmem>>, vector<1x1x7x128xbf16>
    %218 = vector.shape_cast %217 : vector<1x1x7x128xbf16> to vector<7x128xbf16>
    %219 = arith.extf %218 : vector<7x128xbf16> to vector<7x128xf32>
    %220 = vector.shape_cast %219 : vector<7x128xf32> to vector<7x1x128xf32>
    %c5_57 = arith.constant 5 : index
    %c0_58 = arith.constant 0 : index
    %c0_59 = arith.constant 0 : index
    %221 = vector.load %arg12[%c5_57, %c0_58, %c0_59] : memref<8x16x128xf32, #tpu.memory_space<vmem>>, vector<1x16x128xf32>
    %222 = vector.shape_cast %221 : vector<1x16x128xf32> to vector<16x128xf32>
    %223 = vector.shape_cast %222 : vector<16x128xf32> to vector<1x16x128xf32>
    %224 = vector.broadcast %220 : vector<7x1x128xf32> to vector<7x16x128xf32>
    %225 = vector.broadcast %223 : vector<1x16x128xf32> to vector<7x16x128xf32>
    %226 = arith.mulf %224, %225 : vector<7x16x128xf32>
    %227 = arith.addf %216, %226 : vector<7x16x128xf32>
    %c0_60 = arith.constant 0 : index
    %c6 = arith.constant 6 : index
    %c0_61 = arith.constant 0 : index
    %c0_62 = arith.constant 0 : index
    %228 = vector.load %arg2[%c0_60, %c6, %c0_61, %c0_62] : memref<1x8x7x128xbf16, #tpu.memory_space<vmem>>, vector<1x1x7x128xbf16>
    %229 = vector.shape_cast %228 : vector<1x1x7x128xbf16> to vector<7x128xbf16>
    %230 = arith.extf %229 : vector<7x128xbf16> to vector<7x128xf32>
    %231 = vector.shape_cast %230 : vector<7x128xf32> to vector<7x1x128xf32>
    %c6_63 = arith.constant 6 : index
    %c0_64 = arith.constant 0 : index
    %c0_65 = arith.constant 0 : index
    %232 = vector.load %arg12[%c6_63, %c0_64, %c0_65] : memref<8x16x128xf32, #tpu.memory_space<vmem>>, vector<1x16x128xf32>
    %233 = vector.shape_cast %232 : vector<1x16x128xf32> to vector<16x128xf32>
    %234 = vector.shape_cast %233 : vector<16x128xf32> to vector<1x16x128xf32>
    %235 = vector.broadcast %231 : vector<7x1x128xf32> to vector<7x16x128xf32>
    %236 = vector.broadcast %234 : vector<1x16x128xf32> to vector<7x16x128xf32>
    %237 = arith.mulf %235, %236 : vector<7x16x128xf32>
    %238 = arith.addf %227, %237 : vector<7x16x128xf32>
    %c0_66 = arith.constant 0 : index
    %c7 = arith.constant 7 : index
    %c0_67 = arith.constant 0 : index
    %c0_68 = arith.constant 0 : index
    %239 = vector.load %arg2[%c0_66, %c7, %c0_67, %c0_68] : memref<1x8x7x128xbf16, #tpu.memory_space<vmem>>, vector<1x1x7x128xbf16>
    %240 = vector.shape_cast %239 : vector<1x1x7x128xbf16> to vector<7x128xbf16>
    %241 = arith.extf %240 : vector<7x128xbf16> to vector<7x128xf32>
    %242 = vector.shape_cast %241 : vector<7x128xf32> to vector<7x1x128xf32>
    %c7_69 = arith.constant 7 : index
    %c0_70 = arith.constant 0 : index
    %c0_71 = arith.constant 0 : index
    %243 = vector.load %arg12[%c7_69, %c0_70, %c0_71] : memref<8x16x128xf32, #tpu.memory_space<vmem>>, vector<1x16x128xf32>
    %244 = vector.shape_cast %243 : vector<1x16x128xf32> to vector<16x128xf32>
    %245 = vector.shape_cast %244 : vector<16x128xf32> to vector<1x16x128xf32>
    %246 = vector.broadcast %242 : vector<7x1x128xf32> to vector<7x16x128xf32>
    %247 = vector.broadcast %245 : vector<1x16x128xf32> to vector<7x16x128xf32>
    %248 = arith.mulf %246, %247 : vector<7x16x128xf32>
    %249 = arith.addf %238, %248 : vector<7x16x128xf32>
    %250 = vector.shape_cast %249 : vector<7x16x128xf32> to vector<112x128xf32>
    %c0_72 = arith.constant 0 : index
    %c0_73 = arith.constant 0 : index
    %251 = vector.load %arg9[%c0_72, %c0_73] : memref<32x112xf32, #tpu.memory_space<vmem>>, vector<32x112xf32>
    %cst_74 = arith.constant dense<0.000000e+00> : vector<32x128xf32>
    %252 = tpu.matmul %251, %250, %cst_74 {dimension_numbers = #tpu.dot_dimension_numbers<[1], [0], [0], [1], [0, 0, 1, 1], [], []>} : vector<32x112xf32>, vector<112x128xf32>, vector<32x128xf32> -> vector<32x128xf32>
    %253 = arith.addf %160, %252 : vector<32x128xf32>
    %cst_75 = arith.constant 0.000000e+00 : f32
    %254 = vector.broadcast %cst_75 : f32 to vector<32x128xf32>
    %255 = arith.cmpf ogt, %253, %254 : vector<32x128xf32>
    %cst_76 = arith.constant 1.000000e-01 : f32
    %256 = vector.broadcast %cst_76 : f32 to vector<32x128xf32>
    %257 = arith.mulf %256, %253 : vector<32x128xf32>
    %258 = arith.select %255, %253, %257 : vector<32x128xi1>, vector<32x128xf32>
    %c0_77 = arith.constant 0 : index
    %c0_78 = arith.constant 0 : index
    %c0_79 = arith.constant 0 : index
    %259 = vector.load %arg11[%c0_77, %c0_78, %c0_79] : memref<1x32x128xf32, #tpu.memory_space<vmem>>, vector<1x32x128xf32>
    %260 = vector.shape_cast %259 : vector<1x32x128xf32> to vector<32x128xf32>
    %261 = vector.shape_cast %258 : vector<32x128xf32> to vector<1x32x128xf32>
    tpu.vector_store %arg11[%c0_77, %c0_78, %c0_79], %261 {strides = array<i32>} : memref<1x32x128xf32, #tpu.memory_space<vmem>>, vector<1x32x128xf32>,
    return
  }
  func.func @transform_0(%arg0: i32, %arg1: i32) -> (i32, i32, i32, i32) {
    %c0_i32 = arith.constant 0 : i32
    %c0_i32_0 = arith.constant 0 : i32
    %c0_i32_1 = arith.constant 0 : i32
    return %arg0, %c0_i32, %c0_i32_0, %arg1 : i32, i32, i32, i32
  }
  func.func @transform_1(%arg0: i32, %arg1: i32) -> (i32, i32) {
    %c0_i32 = arith.constant 0 : i32
    %c0_i32_0 = arith.constant 0 : i32
    %c0_i32_1 = arith.constant 0 : i32
    return %c0_i32, %c0_i32_0 : i32, i32
  }
  func.func @transform_2(%arg0: i32, %arg1: i32) -> (i32, i32) {
    %c0_i32 = arith.constant 0 : i32
    %c0_i32_0 = arith.constant 0 : i32
    %c0_i32_1 = arith.constant 0 : i32
    return %c0_i32, %c0_i32_0 : i32, i32
  }
  func.func @transform_3(%arg0: i32, %arg1: i32) -> (i32, i32) {
    %c0_i32 = arith.constant 0 : i32
    %c0_i32_0 = arith.constant 0 : i32
    %c0_i32_1 = arith.constant 0 : i32
    return %c0_i32, %c0_i32_0 : i32, i32
  }
  func.func @transform_4(%arg0: i32, %arg1: i32) -> (i32, i32) {
    %c0_i32 = arith.constant 0 : i32
    %c0_i32_0 = arith.constant 0 : i32
    %c0_i32_1 = arith.constant 0 : i32
    return %c0_i32, %c0_i32_0 : i32, i32
  }
  func.func @transform_5(%arg0: i32, %arg1: i32) -> (i32, i32) {
    %c0_i32 = arith.constant 0 : i32
    %c0_i32_0 = arith.constant 0 : i32
    %c0_i32_1 = arith.constant 0 : i32
    return %c0_i32, %c0_i32_0 : i32, i32
  }
  func.func @transform_6(%arg0: i32, %arg1: i32) -> (i32, i32) {
    %c0_i32 = arith.constant 0 : i32
    %c0_i32_0 = arith.constant 0 : i32
    %c0_i32_1 = arith.constant 0 : i32
    return %c0_i32, %c0_i32_0 : i32, i32
  }
  func.func @transform_7(%arg0: i32, %arg1: i32) -> (i32, i32) {
    %c0_i32 = arith.constant 0 : i32
    %c0_i32_0 = arith.constant 0 : i32
    %c0_i32_1 = arith.constant 0 : i32
    return %c0_i32, %c0_i32_0 : i32, i32
  }
  func.func @transform_8(%arg0: i32, %arg1: i32) -> (i32, i32) {
    %c0_i32 = arith.constant 0 : i32
    %c0_i32_0 = arith.constant 0 : i32
    %c0_i32_1 = arith.constant 0 : i32
    return %c0_i32, %c0_i32_0 : i32, i32
  }
  func.func @transform_9(%arg0: i32, %arg1: i32) -> (i32, i32, i32) {
    %c0_i32 = arith.constant 0 : i32
    %c0_i32_0 = arith.constant 0 : i32
    return %arg0, %c0_i32, %arg1 : i32, i32, i32
  }
}

</mosaic_0001>

<llo_original>
// kernel: custom-call.8
$region0: #{custom-call.8}
  %s0 = inlined_call_operand.vmem [shape: f32[2,16], index: 0, kind: output, shape index: {}]

// kernel: neg.1
$region0: #{neg.1}
  #allocation0 [shape = 's32[1]{0}', space=sflag, size = 0x4, scoped, tag = 'scoped memory for neg.1']
  %s0 = inlined_call_operand.vmem [shape: f32[2,8,16], index: 0, kind: input, shape index: {}]
  %s1 = inlined_call_operand.vmem [shape: f32[2,8,16], index: 1, kind: output, shape index: {}]
  %v2 = vld [vmem:[%s0] sm:$0xff]
  %3 = xla_tuple %v2
  %4 = xla_tuple %3
  %v5 = vxor.u32 %v2, 2147483648
  %6 = xla_tuple %v5
  %7 = vst [vmem:[%s1] sm:$0xff] %v5
  %s8 = scalar_lea.vmem %s0, 8
  %v9 = vld [vmem:[%s8] sm:$0xff]
  %10 = xla_tuple %v9
  %11 = xla_tuple %10
  %v12 = vxor.u32 %v9, 2147483648
  %13 = xla_tuple %v12
  %s14 = scalar_lea.vmem %s1, 8
  %15 = vst [vmem:[%s14] sm:$0xff] %v12

// kernel: pointconvd_forward.1
$region0: #{pointconvd_forward.1}
  #allocation0 [shape = 'u32[]', space=smem, size = 0x4, offset = 0x4, fixed_abs, tag = 'smem constant byte address 0x4 - core index']
  #allocation1 [shape = 'u32[144,128]{1,0:T(1,128)}', space=vmem, size = 0x12000, scoped, tag = 'internal scratch']
  #allocation2 [shape = 'f32[8,16,128]{2,1,0:T(8,128)}', space=vmem, size = 0x10000, scoped, tag = 'scratch operand']
  %s0 = inlined_call_operand.vmem [shape: bf16[2,8,7,128], index: 0, kind: input, shape index: {}]
  %s1 = inlined_call_operand.vmem [shape: f32[8,3], index: 1, kind: input, shape index: {}]
  %s2 = inlined_call_operand.vmem [shape: f32[8,1], index: 2, kind: input, shape index: {}]
  %s3 = inlined_call_operand.vmem [shape: f32[8,8], index: 3, kind: input, shape index: {}]
  %s4 = inlined_call_operand.vmem [shape: f32[8,1], index: 4, kind: input, shape index: {}]
  %s5 = inlined_call_operand.vmem [shape: f32[16,8], index: 5, kind: input, shape index: {}]
  %s6 = inlined_call_operand.vmem [shape: f32[16,1], index: 6, kind: input, shape index: {}]
  %s7 = inlined_call_operand.vmem [shape: f32[32,112], index: 7, kind: input, shape index: {}]
  %s8 = inlined_call_operand.vmem [shape: f32[32,1], index: 8, kind: input, shape index: {}]
  %s9 = inlined_call_operand.vmem [shape: f32[2,32,128], index: 9, kind: output, shape index: {}]
  %s10 = sld [smem:[#allocation0]]
  $region69: #{pointconvd_forward.1} parent=0
    _
  %s12 = ssub.s32 1, %s10
  %s13 = scalar_select 0, %s12, %s10
  loop: start=0, step=1, limit=4
  $region2: #{pointconvd_forward.1} parent=0 // loop_pre_header
    _
  $region3: #{pointconvd_forward.1} parent=0 // loop_header
    %s15 = sphi 0, %s19
    %p16 = scmp.ge.s32.totalorder %s15, 4
    %s22 = sphi 0, %s34
    %s23 = sphi 0, %s30
    %s24 = sphi 0, %s22
    %s25 = sphi 0, %s23
    %s26 = sphi 0, %s24
    %s27 = sphi 0, %s25
    %s39 = sphi 0, %s41
    %s42 = sphi 0, %s39
    %s43 = sphi 0, %s42
    %s59 = sphi 0, %s43
    %s63 = sphi 0, %s63
    %s65 = sphi 0, %s63
    %s66 = sphi 0, %s65
    %s80 = sphi 0, %s66
    %s84 = sphi 0, %s84
    %s86 = sphi 0, %s84
    %s87 = sphi 0, %s86
    %s101 = sphi 0, %s87
    %s105 = sphi 0, %s105
    %s107 = sphi 0, %s105
    %s108 = sphi 0, %s107
    %s122 = sphi 0, %s108
    %s126 = sphi 0, %s126
    %s128 = sphi 0, %s126
    %s129 = sphi 0, %s128
    %s143 = sphi 0, %s129
    %s147 = sphi 0, %s147
    %s149 = sphi 0, %s147
    %s150 = sphi 0, %s149
    %s164 = sphi 0, %s150
    %s168 = sphi 0, %s168
    %s170 = sphi 0, %s168
    %s171 = sphi 0, %s170
    %s185 = sphi 0, %s171
    %s189 = sphi 0, %s189
    %s191 = sphi 0, %s189
    %s192 = sphi 0, %s191
    %s206 = sphi 0, %s192
    %s210 = sphi 0, %s210
    %s212 = sphi 0, %s210
    %s213 = sphi 0, %s212
    %s227 = sphi 0, %s213
    %s235 = sphi 0, %s237
    %s238 = sphi 0, %s235
    %s239 = sphi 0, %s238
    %s255 = sphi 0, %s239
  $region4: #{pointconvd_forward.1} parent=0 // loop_header_branch
    %18 = sbr.rel (%p16) target = $region8
  $region5: #{pointconvd_forward.1} parent=0 // loop_body
    %s20 = ssub.s32 %s15, 1
    %s21 = ssub.s32 %s15, 2
    %s28 = sadd.s32 1, %s23
    %p29 = scmp.ge.s32.totalorder %s28, 1
    %s30 = scalar_select %p29, 0, %s28
    %s31 = sadd.s32 1, %s22
    %s32 = scalar_select %p29, %s31, %s22
    %p33 = scmp.ge.s32.totalorder %s32, 2
    %s34 = scalar_select %p33, 0, %s32
    %s35 = ssub.s32 %s22, %s34
    %s36 = ssub.s32 %s23, %s30
    %s37 = sor.u32 %s35, %s36
    %p38 = scmp.eq.s32.totalorder %s37, 0
    %s40 = sadd.s32 %s39, 1
    %s41 = scalar_select %p38, %s39, %s40
    %p44 = pneg %p38
    %p45 = scmp.eq.s32.totalorder %s15, 1
    %p46 = por %p44, %p45
    %p47 = scmp.ne.s32.totalorder %s39, %s42
    %p48 = scmp.eq.s32.totalorder %s15, 0
    %p49 = por %p47, %p48
    %p50 = scmp.ne.s32.totalorder %s39, %s42
    %p51 = scmp.eq.s32.totalorder %s20, 1
    %p52 = por %p50, %p51
    %p53 = scmp.ne.s32.totalorder %s42, %s43
    %p54 = scmp.eq.s32.totalorder %s20, 0
    %p55 = por %p53, %p54
    %p56 = scmp.ne.s32.totalorder %s42, %s43
    %p57 = scmp.eq.s32.totalorder %s21, 1
    %p58 = por %p56, %p57
    %p60 = scmp.ne.s32.totalorder %s43, %s59
    %p61 = scmp.eq.s32.totalorder %s21, 0
    %p62 = por %p60, %p61
    %s64 = sadd.s32 %s63, 1
    %p67 = scmp.eq.s32.totalorder %s15, 1
    %p68 = scmp.ne.s32.totalorder %s63, %s65
    %p69 = scmp.eq.s32.totalorder %s15, 0
    %p70 = por %p68, %p69
    %p71 = scmp.ne.s32.totalorder %s63, %s65
    %p72 = scmp.eq.s32.totalorder %s20, 1
    %p73 = por %p71, %p72
    %p74 = scmp.ne.s32.totalorder %s65, %s66
    %p75 = scmp.eq.s32.totalorder %s20, 0
    %p76 = por %p74, %p75
    %p77 = scmp.ne.s32.totalorder %s65, %s66
    %p78 = scmp.eq.s32.totalorder %s21, 1
    %p79 = por %p77, %p78
    %p81 = scmp.ne.s32.totalorder %s66, %s80
    %p82 = scmp.eq.s32.totalorder %s21, 0
    %p83 = por %p81, %p82
    %s85 = sadd.s32 %s84, 1
    %p88 = scmp.eq.s32.totalorder %s15, 1
    %p89 = scmp.ne.s32.totalorder %s84, %s86
    %p90 = scmp.eq.s32.totalorder %s15, 0
    %p91 = por %p89, %p90
    %p92 = scmp.ne.s32.totalorder %s84, %s86
    %p93 = scmp.eq.s32.totalorder %s20, 1
    %p94 = por %p92, %p93
    %p95 = scmp.ne.s32.totalorder %s86, %s87
    %p96 = scmp.eq.s32.totalorder %s20, 0
    %p97 = por %p95, %p96
    %p98 = scmp.ne.s32.totalorder %s86, %s87
    %p99 = scmp.eq.s32.totalorder %s21, 1
    %p100 = por %p98, %p99
    %p102 = scmp.ne.s32.totalorder %s87, %s101
    %p103 = scmp.eq.s32.totalorder %s21, 0
    %p104 = por %p102, %p103
    %s106 = sadd.s32 %s105, 1
    %p109 = scmp.eq.s32.totalorder %s15, 1
    %p110 = scmp.ne.s32.totalorder %s105, %s107
    %p111 = scmp.eq.s32.totalorder %s15, 0
    %p112 = por %p110, %p111
    %p113 = scmp.ne.s32.totalorder %s105, %s107
    %p114 = scmp.eq.s32.totalorder %s20, 1
    %p115 = por %p113, %p114
    %p116 = scmp.ne.s32.totalorder %s107, %s108
    %p117 = scmp.eq.s32.totalorder %s20, 0
    %p118 = por %p116, %p117
    %p119 = scmp.ne.s32.totalorder %s107, %s108
    %p120 = scmp.eq.s32.totalorder %s21, 1
    %p121 = por %p119, %p120
    %p123 = scmp.ne.s32.totalorder %s108, %s122
    %p124 = scmp.eq.s32.totalorder %s21, 0
    %p125 = por %p123, %p124
    %s127 = sadd.s32 %s126, 1
    %p130 = scmp.eq.s32.totalorder %s15, 1
    %p131 = scmp.ne.s32.totalorder %s126, %s128
    %p132 = scmp.eq.s32.totalorder %s15, 0
    %p133 = por %p131, %p132
    %p134 = scmp.ne.s32.totalorder %s126, %s128
    %p135 = scmp.eq.s32.totalorder %s20, 1
    %p136 = por %p134, %p135
    %p137 = scmp.ne.s32.totalorder %s128, %s129
    %p138 = scmp.eq.s32.totalorder %s20, 0
    %p139 = por %p137, %p138
    %p140 = scmp.ne.s32.totalorder %s128, %s129
    %p141 = scmp.eq.s32.totalorder %s21, 1
    %p142 = por %p140, %p141
    %p144 = scmp.ne.s32.totalorder %s129, %s143
    %p145 = scmp.eq.s32.totalorder %s21, 0
    %p146 = por %p144, %p145
    %s148 = sadd.s32 %s147, 1
    %p151 = scmp.eq.s32.totalorder %s15, 1
    %p152 = scmp.ne.s32.totalorder %s147, %s149
    %p153 = scmp.eq.s32.totalorder %s15, 0
    %p154 = por %p152, %p153
    %p155 = scmp.ne.s32.totalorder %s147, %s149
    %p156 = scmp.eq.s32.totalorder %s20, 1
    %p157 = por %p155, %p156
    %p158 = scmp.ne.s32.totalorder %s149, %s150
    %p159 = scmp.eq.s32.totalorder %s20, 0
    %p160 = por %p158, %p159
    %p161 = scmp.ne.s32.totalorder %s149, %s150
    %p162 = scmp.eq.s32.totalorder %s21, 1
    %p163 = por %p161, %p162
    %p165 = scmp.ne.s32.totalorder %s150, %s164
    %p166 = scmp.eq.s32.totalorder %s21, 0
    %p167 = por %p165, %p166
    %s169 = sadd.s32 %s168, 1
    %p172 = scmp.eq.s32.totalorder %s15, 1
    %p173 = scmp.ne.s32.totalorder %s168, %s170
    %p174 = scmp.eq.s32.totalorder %s15, 0
    %p175 = por %p173, %p174
    %p176 = scmp.ne.s32.totalorder %s168, %s170
    %p177 = scmp.eq.s32.totalorder %s20, 1
    %p178 = por %p176, %p177
    %p179 = scmp.ne.s32.totalorder %s170, %s171
    %p180 = scmp.eq.s32.totalorder %s20, 0
    %p181 = por %p179, %p180
    %p182 = scmp.ne.s32.totalorder %s170, %s171
    %p183 = scmp.eq.s32.totalorder %s21, 1
    %p184 = por %p182, %p183
    %p186 = scmp.ne.s32.totalorder %s171, %s185
    %p187 = scmp.eq.s32.totalorder %s21, 0
    %p188 = por %p186, %p187
    %s190 = sadd.s32 %s189, 1
    %p193 = scmp.eq.s32.totalorder %s15, 1
    %p194 = scmp.ne.s32.totalorder %s189, %s191
    %p195 = scmp.eq.s32.totalorder %s15, 0
    %p196 = por %p194, %p195
    %p197 = scmp.ne.s32.totalorder %s189, %s191
    %p198 = scmp.eq.s32.totalorder %s20, 1
    %p199 = por %p197, %p198
    %p200 = scmp.ne.s32.totalorder %s191, %s192
    %p201 = scmp.eq.s32.totalorder %s20, 0
    %p202 = por %p200, %p201
    %p203 = scmp.ne.s32.totalorder %s191, %s192
    %p204 = scmp.eq.s32.totalorder %s21, 1
    %p205 = por %p203, %p204
    %p207 = scmp.ne.s32.totalorder %s192, %s206
    %p208 = scmp.eq.s32.totalorder %s21, 0
    %p209 = por %p207, %p208
    %s211 = sadd.s32 %s210, 1
    %p214 = scmp.eq.s32.totalorder %s15, 1
    %p215 = scmp.ne.s32.totalorder %s210, %s212
    %p216 = scmp.eq.s32.totalorder %s15, 0
    %p217 = por %p215, %p216
    %p218 = scmp.ne.s32.totalorder %s210, %s212
    %p219 = scmp.eq.s32.totalorder %s20, 1
    %p220 = por %p218, %p219
    %p221 = scmp.ne.s32.totalorder %s212, %s213
    %p222 = scmp.eq.s32.totalorder %s20, 0
    %p223 = por %p221, %p222
    %p224 = scmp.ne.s32.totalorder %s212, %s213
    %p225 = scmp.eq.s32.totalorder %s21, 1
    %p226 = por %p224, %p225
    %p228 = scmp.ne.s32.totalorder %s213, %s227
    %p229 = scmp.eq.s32.totalorder %s21, 0
    %p230 = por %p228, %p229
    %s231 = ssub.s32 %s22, %s34
    %s232 = ssub.s32 %s23, %s30
    %s233 = sor.u32 %s231, %s232
    %p234 = scmp.eq.s32.totalorder %s233, 0
    %s236 = sadd.s32 %s235, 1
    %s237 = scalar_select %p234, %s235, %s236
    %p240 = pneg %p234
    %p241 = scmp.eq.s32.totalorder %s15, 1
    %p242 = por %p240, %p241
    %p243 = scmp.ne.s32.totalorder %s235, %s238
    %p244 = scmp.eq.s32.totalorder %s15, 0
    %p245 = por %p243, %p244
    %p246 = scmp.ne.s32.totalorder %s235, %s238
    %p247 = scmp.eq.s32.totalorder %s20, 1
    %p248 = por %p246, %p247
    %p249 = scmp.ne.s32.totalorder %s238, %s239
    %p250 = scmp.eq.s32.totalorder %s20, 0
    %p251 = por %p249, %p250
    %p252 = scmp.ne.s32.totalorder %s238, %s239
    %p253 = scmp.eq.s32.totalorder %s21, 1
    %p254 = por %p252, %p253
    %p256 = scmp.ne.s32.totalorder %s239, %s255
    %p257 = scmp.eq.s32.totalorder %s21, 0
    %p258 = por %p256, %p257
    %p259 = scmp.le.s32.totalorder 1, %s15
    %p260 = scmp.lt.s32.totalorder %s15, 3
    %p261 = pnand %p259, %p260
    %p262 = pneg %p261
    // Predicated region
    $region9: #{pointconvd_forward.1} parent=5 // pred_check
      _
    $region10: #{pointconvd_forward.1} parent=5 // pred_check_branch
      %264 = sbr.rel (%p261) target = $region12
    $region11: #{pointconvd_forward.1} parent=5 // pred_region
      %s265 = ssub.s32 %s15, 1
      // Predicated region
      $region13: #{pointconvd_forward.1} parent=11 // pred_check
        %p266 = pneg %p76
      $region14: #{pointconvd_forward.1} parent=11 // pred_check_branch
        %268 = sbr.rel (%p266) target = $region16
      $region15: #{pointconvd_forward.1} parent=11 // pred_region
        _
      $region16: #{pointconvd_forward.1} parent=11 // pred_fallthru
        _
      // Predicated region
      $region17: #{pointconvd_forward.1} parent=11 // pred_check
        %p269 = pneg %p97
      $region18: #{pointconvd_forward.1} parent=11 // pred_check_branch
        %271 = sbr.rel (%p269) target = $region20
      $region19: #{pointconvd_forward.1} parent=11 // pred_region
        _
      $region20: #{pointconvd_forward.1} parent=11 // pred_fallthru
        _
      // Predicated region
      $region21: #{pointconvd_forward.1} parent=11 // pred_check
        %p272 = pneg %p118
      $region22: #{pointconvd_forward.1} parent=11 // pred_check_branch
        %274 = sbr.rel (%p272) target = $region24
      $region23: #{pointconvd_forward.1} parent=11 // pred_region
        _
      $region24: #{pointconvd_forward.1} parent=11 // pred_fallthru
        _
      // Predicated region
      $region25: #{pointconvd_forward.1} parent=11 // pred_check
        %p275 = pneg %p139
      $region26: #{pointconvd_forward.1} parent=11 // pred_check_branch
        %277 = sbr.rel (%p275) target = $region28
      $region27: #{pointconvd_forward.1} parent=11 // pred_region
        _
      $region28: #{pointconvd_forward.1} parent=11 // pred_fallthru
        _
      // Predicated region
      $region29: #{pointconvd_forward.1} parent=11 // pred_check
        %p278 = pneg %p160
      $region30: #{pointconvd_forward.1} parent=11 // pred_check_branch
        %280 = sbr.rel (%p278) target = $region32
      $region31: #{pointconvd_forward.1} parent=11 // pred_region
        _
      $region32: #{pointconvd_forward.1} parent=11 // pred_fallthru
        _
      // Predicated region
      $region33: #{pointconvd_forward.1} parent=11 // pred_check
        %p281 = pneg %p181
      $region34: #{pointconvd_forward.1} parent=11 // pred_check_branch
        %283 = sbr.rel (%p281) target = $region36
      $region35: #{pointconvd_forward.1} parent=11 // pred_region
        _
      $region36: #{pointconvd_forward.1} parent=11 // pred_fallthru
        _
      // Predicated region
      $region37: #{pointconvd_forward.1} parent=11 // pred_check
        %p284 = pneg %p202
      $region38: #{pointconvd_forward.1} parent=11 // pred_check_branch
        %286 = sbr.rel (%p284) target = $region40
      $region39: #{pointconvd_forward.1} parent=11 // pred_region
        _
      $region40: #{pointconvd_forward.1} parent=11 // pred_fallthru
        _
      // Predicated region
      $region41: #{pointconvd_forward.1} parent=11 // pred_check
        %p287 = pneg %p223
      $region42: #{pointconvd_forward.1} parent=11 // pred_check_branch
        %289 = sbr.rel (%p287) target = $region44
      $region43: #{pointconvd_forward.1} parent=11 // pred_region
        _
      $region44: #{pointconvd_forward.1} parent=11 // pred_fallthru
        _
    $region12: #{pointconvd_forward.1} parent=5 // pred_fallthru
      _
    %p290 = scmp.lt.s32.totalorder %s15, 2
    // Predicated region
    $region45: #{pointconvd_forward.1} parent=5 // pred_check
      %p291 = pneg %p290
    $region46: #{pointconvd_forward.1} parent=5 // pred_check_branch
      %293 = sbr.rel (%p291) target = $region48
    $region47: #{pointconvd_forward.1} parent=5 // pred_region
      // Predicated region
      $region49: #{pointconvd_forward.1} parent=47 // pred_check
        %p294 = pneg %p49
      $region50: #{pointconvd_forward.1} parent=47 // pred_check_branch
        %296 = sbr.rel (%p294) target = $region52
      $region51: #{pointconvd_forward.1} parent=47 // pred_region
        %p297 = scmp.lt.s32.totalorder %s22, 1
        %s298 = scalar_select %p297, %s22, 1
        %p299 = scmp.lt.s32.totalorder %s23, 0
        %s300 = scalar_select %p299, %s23, 0
        %s301 = smul.addr %s298, 8
        %s302 = sadd.s32 %s300, %s301
        %s303 = smul.addr %s302, 4
        %s304 = scalar_lea.vmem %s0, %s303
      $region52: #{pointconvd_forward.1} parent=47 // pred_fallthru
        _
    $region48: #{pointconvd_forward.1} parent=5 // pred_fallthru
      _
    %p305 = scmp.le.s32.totalorder 1, %s15
    %p306 = scmp.lt.s32.totalorder %s15, 3
    %p307 = pnand %p305, %p306
    %p308 = pneg %p307
    // Predicated region
    $region53: #{pointconvd_forward.1} parent=5 // pred_check
      _
    $region54: #{pointconvd_forward.1} parent=5 // pred_check_branch
      %310 = sbr.rel (%p307) target = $region56
    $region55: #{pointconvd_forward.1} parent=5 // pred_region
      %s311 = ssub.s32 %s15, 1
      %p312 = scmp.lt.s32.totalorder %s24, 1
      %s313 = scalar_select %p312, %s24, 1
      %p314 = scmp.lt.s32.totalorder %s25, 0
      %s315 = scalar_select %p314, %s25, 0
      %s316 = smul.addr %s313, 8
      %s317 = sadd.s32 %s315, %s316
      %s318 = smul.addr %s317, 4
      %s319 = scalar_lea.vmem %s0, %s318
      %p320 = pneg %p55
      %p321 = pneg %p52
      %p322 = pneg %p76
      %p323 = pneg %p73
      %p324 = pneg %p97
      %p325 = pneg %p94
      %p326 = pneg %p118
      %p327 = pneg %p115
      %p328 = pneg %p139
      %p329 = pneg %p136
      %p330 = pneg %p160
      %p331 = pneg %p157
      %p332 = pneg %p181
      %p333 = pneg %p178
      %p334 = pneg %p202
      %p335 = pneg %p199
      %p336 = pneg %p223
      %p337 = pneg %p220
      %p338 = pneg %p251
      %p339 = pneg %p248
      %p340 = scmp.lt.s32.totalorder %s24, 1
      %s341 = scalar_select %p340, %s24, 1
      %p342 = scmp.lt.s32.totalorder %s25, 0
      %s343 = scalar_select %p342, %s25, 0
      %s344 = smul.addr %s341, 4
      %s345 = sadd.s32 %s343, %s344
      %s346 = smul.addr %s345, 8
      %s347 = scalar_lea.vmem %s9, %s346
      %p348 = scmp.lt.s32.totalorder %s24, 1
      %s349 = scalar_select %p348, %s24, 1
      %p350 = scmp.lt.s32.totalorder %s25, 0
      %s351 = scalar_select %p350, %s25, 0
      %s352 = smul.addr %s349, 8
      %s353 = sadd.s32 %s351, %s352
      %s354 = smul.addr %s353, 4
      %s355 = scalar_lea.vmem %s0, %s354
      %p356 = scmp.lt.s32.totalorder %s24, 1
      %s357 = scalar_select %p356, %s24, 1
      %p358 = scmp.lt.s32.totalorder %s25, 0
      %s359 = scalar_select %p358, %s25, 0
      %s360 = smul.addr %s357, 4
      %s361 = sadd.s32 %s359, %s360
      %s362 = smul.addr %s361, 8
      %s363 = scalar_lea.vmem %s9, %s362
      %v364 = vld [vmem:[%s355] sm:$0x3]
      %v365 = vld [vmem:[%s355 + $0x4] sm:$0x3]
      %v366 = vld [vmem:[%s355 + $0x8] sm:$0x3]
      %v367 = vld [vmem:[%s355 + $0xc] sm:$0x3]
      %v368 = vld [vmem:[%s355 + $0x10] sm:$0x3]
      %v369 = vld [vmem:[%s355 + $0x14] sm:$0x3]
      %v370 = vld [vmem:[%s355 + $0x18] sm:$0x3]
      %v371 = vld [vmem:[%s355 + $0x1c] sm:$0x3]
      %v372 = vunpack.c.l.bf16 %v364
      %v373 = vunpack.c.l.bf16 %v365
      %v374 = vunpack.c.l.bf16 %v366
      %v375 = vunpack.c.l.bf16 %v367
      %v376 = vunpack.c.l.bf16 %v368
      %v377 = vunpack.c.l.bf16 %v369
      %v378 = vunpack.c.l.bf16 %v370
      %v379 = vunpack.c.l.bf16 %v371
      %v380 = vld [vmem:[%s1] sm:$0xff]
      %v381 = vld [vmem:[%s2] sm:$0xff]
      %v382 = vld [vmem:[%s3] sm:$0xff]
      %v383 = vld [vmem:[%s4] sm:$0xff]
      %v384 = vld [vmem:[%s5] sm:$0xff]
      %v385 = vld [vmem:[%s5 + $0x8] sm:$0xff]
      %v386 = vld [vmem:[%s6] sm:$0xff]
      %v387 = vld [vmem:[%s6 + $0x8] sm:$0xff]
      %389 = vset.pattern.permute.xlu0 0
      %390 = vperm.xlu0 %389, %v381
      %v391 = vpop.permute.xlu0 %390
      %394 = vset.pattern.permute.xlu0 0
      %395 = vperm.xlu0 %394, %v380
      %v396 = vpop.permute.xlu0 %395
      %v398 = vlaneseq
      %v399 = vshrl.u32 %v398, 7
      %v400 = vsub.s32 0, %v399
      %v401 = vrot.slane %v372, %v400
      %v402 = vlaneseq
      %v403 = vshrl.u32 %v402, 7
      %v404 = vsub.s32 0, %v403
      %v405 = vrot.slane %v373, %v404
      %v406 = vlaneseq
      %v407 = vshrl.u32 %v406, 7
      %v408 = vsub.s32 0, %v407
      %v409 = vrot.slane %v374, %v408
      %v410 = vlaneseq
      %v411 = vshrl.u32 %v410, 7
      %v412 = vsub.s32 0, %v411
      %v413 = vrot.slane %v375, %v412
      %v414 = vlaneseq
      %v415 = vshrl.u32 %v414, 7
      %v416 = vsub.s32 0, %v415
      %v417 = vrot.slane %v376, %v416
      %v418 = vlaneseq
      %v419 = vshrl.u32 %v418, 7
      %v420 = vsub.s32 0, %v419
      %v421 = vrot.slane %v377, %v420
      %v422 = vlaneseq
      %v423 = vshrl.u32 %v422, 7
      %v424 = vsub.s32 0, %v423
      %v425 = vrot.slane %v378, %v424
      %v426 = vlaneseq
      %v427 = vshrl.u32 %v426, 7
      %v428 = vsub.s32 0, %v427
      %v429 = vrot.slane %v379, %v428
      %v430 = vmul.f32 %v396, %v401
      %v431 = vmul.f32 %v396, %v405
      %v432 = vmul.f32 %v396, %v409
      %v433 = vmul.f32 %v396, %v413
      %v434 = vmul.f32 %v396, %v417
      %v435 = vmul.f32 %v396, %v421
      %v436 = vmul.f32 %v396, %v425
      %v437 = vmul.f32 %v396, %v429
      %v438 = vadd.f32 %v391, %v430
      %v439 = vadd.f32 %v391, %v431
      %v440 = vadd.f32 %v391, %v432
      %v441 = vadd.f32 %v391, %v433
      %v442 = vadd.f32 %v391, %v434
      %v443 = vadd.f32 %v391, %v435
      %v444 = vadd.f32 %v391, %v436
      %v445 = vadd.f32 %v391, %v437
      %446 = vset.pattern.permute.xlu0 1
      %447 = vperm.xlu0 %446, %v380
      %v448 = vpop.permute.xlu0 %447
      %v450 = vlaneseq
      %v451 = vshrl.u32 %v450, 7
      %v452 = vsub.s32 1, %v451
      %v453 = vrot.slane %v372, %v452
      %v454 = vlaneseq
      %v455 = vshrl.u32 %v454, 7
      %v456 = vsub.s32 1, %v455
      %v457 = vrot.slane %v373, %v456
      %v458 = vlaneseq
      %v459 = vshrl.u32 %v458, 7
      %v460 = vsub.s32 1, %v459
      %v461 = vrot.slane %v374, %v460
      %v462 = vlaneseq
      %v463 = vshrl.u32 %v462, 7
      %v464 = vsub.s32 1, %v463
      %v465 = vrot.slane %v375, %v464
      %v466 = vlaneseq
      %v467 = vshrl.u32 %v466, 7
      %v468 = vsub.s32 1, %v467
      %v469 = vrot.slane %v376, %v468
      %v470 = vlaneseq
      %v471 = vshrl.u32 %v470, 7
      %v472 = vsub.s32 1, %v471
      %v473 = vrot.slane %v377, %v472
      %v474 = vlaneseq
      %v475 = vshrl.u32 %v474, 7
      %v476 = vsub.s32 1, %v475
      %v477 = vrot.slane %v378, %v476
      %v478 = vlaneseq
      %v479 = vshrl.u32 %v478, 7
      %v480 = vsub.s32 1, %v479
      %v481 = vrot.slane %v379, %v480
      %v482 = vmul.f32 %v448, %v453
      %v483 = vmul.f32 %v448, %v457
      %v484 = vmul.f32 %v448, %v461
      %v485 = vmul.f32 %v448, %v465
      %v486 = vmul.f32 %v448, %v469
      %v487 = vmul.f32 %v448, %v473
      %v488 = vmul.f32 %v448, %v477
      %v489 = vmul.f32 %v448, %v481
      %v490 = vadd.f32 %v438, %v482
      %v491 = vadd.f32 %v439, %v483
      %v492 = vadd.f32 %v440, %v484
      %v493 = vadd.f32 %v441, %v485
      %v494 = vadd.f32 %v442, %v486
      %v495 = vadd.f32 %v443, %v487
      %v496 = vadd.f32 %v444, %v488
      %v497 = vadd.f32 %v445, %v489
      %498 = vset.pattern.permute.xlu0 2
      %499 = vperm.xlu0 %498, %v380
      %v500 = vpop.permute.xlu0 %499
      %v502 = vlaneseq
      %v503 = vshrl.u32 %v502, 7
      %v504 = vsub.s32 2, %v503
      %v505 = vrot.slane %v372, %v504
      %v506 = vlaneseq
      %v507 = vshrl.u32 %v506, 7
      %v508 = vsub.s32 2, %v507
      %v509 = vrot.slane %v373, %v508
      %v510 = vlaneseq
      %v511 = vshrl.u32 %v510, 7
      %v512 = vsub.s32 2, %v511
      %v513 = vrot.slane %v374, %v512
      %v514 = vlaneseq
      %v515 = vshrl.u32 %v514, 7
      %v516 = vsub.s32 2, %v515
      %v517 = vrot.slane %v375, %v516
      %v518 = vlaneseq
      %v519 = vshrl.u32 %v518, 7
      %v520 = vsub.s32 2, %v519
      %v521 = vrot.slane %v376, %v520
      %v522 = vlaneseq
      %v523 = vshrl.u32 %v522, 7
      %v524 = vsub.s32 2, %v523
      %v525 = vrot.slane %v377, %v524
      %v526 = vlaneseq
      %v527 = vshrl.u32 %v526, 7
      %v528 = vsub.s32 2, %v527
      %v529 = vrot.slane %v378, %v528
      %v530 = vlaneseq
      %v531 = vshrl.u32 %v530, 7
      %v532 = vsub.s32 2, %v531
      %v533 = vrot.slane %v379, %v532
      %v534 = vmul.f32 %v500, %v505
      %v535 = vmul.f32 %v500, %v509
      %v536 = vmul.f32 %v500, %v513
      %v537 = vmul.f32 %v500, %v517
      %v538 = vmul.f32 %v500, %v521
      %v539 = vmul.f32 %v500, %v525
      %v540 = vmul.f32 %v500, %v529
      %v541 = vmul.f32 %v500, %v533
      %v542 = vadd.f32 %v490, %v534
      %v543 = vadd.f32 %v491, %v535
      %v544 = vadd.f32 %v492, %v536
      %v545 = vadd.f32 %v493, %v537
      %v546 = vadd.f32 %v494, %v538
      %v547 = vadd.f32 %v495, %v539
      %v548 = vadd.f32 %v496, %v540
      %v549 = vadd.f32 %v497, %v541
      %v550 = vmax.f32 %v542, 0.0
      %v551 = vmax.f32 %v543, 0.0
      %v552 = vmax.f32 %v544, 0.0
      %v553 = vmax.f32 %v545, 0.0
      %v554 = vmax.f32 %v546, 0.0
      %v555 = vmax.f32 %v547, 0.0
      %v556 = vmax.f32 %v548, 0.0
      %v557 = vmax.f32 %v549, 0.0
      %559 = vset.pattern.permute.xlu0 0
      %560 = vperm.xlu0 %559, %v383
      %v561 = vpop.permute.xlu0 %560
      %564 = vset.pattern.permute.xlu0 0
      %565 = vperm.xlu0 %564, %v382
      %v566 = vpop.permute.xlu0 %565
      %v568 = vlaneseq
      %v569 = vshrl.u32 %v568, 7
      %v570 = vsub.s32 0, %v569
      %v571 = vrot.slane %v550, %v570
      %v572 = vlaneseq
      %v573 = vshrl.u32 %v572, 7
      %v574 = vsub.s32 0, %v573
      %v575 = vrot.slane %v551, %v574
      %v576 = vlaneseq
      %v577 = vshrl.u32 %v576, 7
      %v578 = vsub.s32 0, %v577
      %v579 = vrot.slane %v552, %v578
      %v580 = vlaneseq
      %v581 = vshrl.u32 %v580, 7
      %v582 = vsub.s32 0, %v581
      %v583 = vrot.slane %v553, %v582
      %v584 = vlaneseq
      %v585 = vshrl.u32 %v584, 7
      %v586 = vsub.s32 0, %v585
      %v587 = vrot.slane %v554, %v586
      %v588 = vlaneseq
      %v589 = vshrl.u32 %v588, 7
      %v590 = vsub.s32 0, %v589
      %v591 = vrot.slane %v555, %v590
      %v592 = vlaneseq
      %v593 = vshrl.u32 %v592, 7
      %v594 = vsub.s32 0, %v593
      %v595 = vrot.slane %v556, %v594
      %v596 = vlaneseq
      %v597 = vshrl.u32 %v596, 7
      %v598 = vsub.s32 0, %v597
      %v599 = vrot.slane %v557, %v598
      %v600 = vmul.f32 %v566, %v571
      %v601 = vmul.f32 %v566, %v575
      %v602 = vmul.f32 %v566, %v579
      %v603 = vmul.f32 %v566, %v583
      %v604 = vmul.f32 %v566, %v587
      %v605 = vmul.f32 %v566, %v591
      %v606 = vmul.f32 %v566, %v595
      %v607 = vmul.f32 %v566, %v599
      %v608 = vadd.f32 %v561, %v600
      %v609 = vadd.f32 %v561, %v601
      %v610 = vadd.f32 %v561, %v602
      %v611 = vadd.f32 %v561, %v603
      %v612 = vadd.f32 %v561, %v604
      %v613 = vadd.f32 %v561, %v605
      %v614 = vadd.f32 %v561, %v606
      %v615 = vadd.f32 %v561, %v607
      %616 = vset.pattern.permute.xlu0 1
      %617 = vperm.xlu0 %616, %v382
      %v618 = vpop.permute.xlu0 %617
      %v620 = vlaneseq
      %v621 = vshrl.u32 %v620, 7
      %v622 = vsub.s32 1, %v621
      %v623 = vrot.slane %v550, %v622
      %v624 = vlaneseq
      %v625 = vshrl.u32 %v624, 7
      %v626 = vsub.s32 1, %v625
      %v627 = vrot.slane %v551, %v626
      %v628 = vlaneseq
      %v629 = vshrl.u32 %v628, 7
      %v630 = vsub.s32 1, %v629
      %v631 = vrot.slane %v552, %v630
      %v632 = vlaneseq
      %v633 = vshrl.u32 %v632, 7
      %v634 = vsub.s32 1, %v633
      %v635 = vrot.slane %v553, %v634
      %v636 = vlaneseq
      %v637 = vshrl.u32 %v636, 7
      %v638 = vsub.s32 1, %v637
      %v639 = vrot.slane %v554, %v638
      %v640 = vlaneseq
      %v641 = vshrl.u32 %v640, 7
      %v642 = vsub.s32 1, %v641
      %v643 = vrot.slane %v555, %v642
      %v644 = vlaneseq
      %v645 = vshrl.u32 %v644, 7
      %v646 = vsub.s32 1, %v645
      %v647 = vrot.slane %v556, %v646
      %v648 = vlaneseq
      %v649 = vshrl.u32 %v648, 7
      %v650 = vsub.s32 1, %v649
      %v651 = vrot.slane %v557, %v650
      %v652 = vmul.f32 %v618, %v623
      %v653 = vmul.f32 %v618, %v627
      %v654 = vmul.f32 %v618, %v631
      %v655 = vmul.f32 %v618, %v635
      %v656 = vmul.f32 %v618, %v639
      %v657 = vmul.f32 %v618, %v643
      %v658 = vmul.f32 %v618, %v647
      %v659 = vmul.f32 %v618, %v651
      %v660 = vadd.f32 %v608, %v652
      %v661 = vadd.f32 %v609, %v653
      %v662 = vadd.f32 %v610, %v654
      %v663 = vadd.f32 %v611, %v655
      %v664 = vadd.f32 %v612, %v656
      %v665 = vadd.f32 %v613, %v657
      %v666 = vadd.f32 %v614, %v658
      %v667 = vadd.f32 %v615, %v659
      %668 = vset.pattern.permute.xlu0 2
      %669 = vperm.xlu0 %668, %v382
      %v670 = vpop.permute.xlu0 %669
      %v672 = vlaneseq
      %v673 = vshrl.u32 %v672, 7
      %v674 = vsub.s32 2, %v673
      %v675 = vrot.slane %v550, %v674
      %v676 = vlaneseq
      %v677 = vshrl.u32 %v676, 7
      %v678 = vsub.s32 2, %v677
      %v679 = vrot.slane %v551, %v678
      %v680 = vlaneseq
      %v681 = vshrl.u32 %v680, 7
      %v682 = vsub.s32 2, %v681
      %v683 = vrot.slane %v552, %v682
      %v684 = vlaneseq
      %v685 = vshrl.u32 %v684, 7
      %v686 = vsub.s32 2, %v685
      %v687 = vrot.slane %v553, %v686
      %v688 = vlaneseq
      %v689 = vshrl.u32 %v688, 7
      %v690 = vsub.s32 2, %v689
      %v691 = vrot.slane %v554, %v690
      %v692 = vlaneseq
      %v693 = vshrl.u32 %v692, 7
      %v694 = vsub.s32 2, %v693
      %v695 = vrot.slane %v555, %v694
      %v696 = vlaneseq
      %v697 = vshrl.u32 %v696, 7
      %v698 = vsub.s32 2, %v697
      %v699 = vrot.slane %v556, %v698
      %v700 = vlaneseq
      %v701 = vshrl.u32 %v700, 7
      %v702 = vsub.s32 2, %v701
      %v703 = vrot.slane %v557, %v702
      %v704 = vmul.f32 %v670, %v675
      %v705 = vmul.f32 %v670, %v679
      %v706 = vmul.f32 %v670, %v683
      %v707 = vmul.f32 %v670, %v687
      %v708 = vmul.f32 %v670, %v691
      %v709 = vmul.f32 %v670, %v695
      %v710 = vmul.f32 %v670, %v699
      %v711 = vmul.f32 %v670, %v703
      %v712 = vadd.f32 %v660, %v704
      %v713 = vadd.f32 %v661, %v705
      %v714 = vadd.f32 %v662, %v706
      %v715 = vadd.f32 %v663, %v707
      %v716 = vadd.f32 %v664, %v708
      %v717 = vadd.f32 %v665, %v709
      %v718 = vadd.f32 %v666, %v710
      %v719 = vadd.f32 %v667, %v711
      %720 = vset.pattern.permute.xlu0 3
      %721 = vperm.xlu0 %720, %v382
      %v722 = vpop.permute.xlu0 %721
      %v724 = vlaneseq
      %v725 = vshrl.u32 %v724, 7
      %v726 = vsub.s32 3, %v725
      %v727 = vrot.slane %v550, %v726
      %v728 = vlaneseq
      %v729 = vshrl.u32 %v728, 7
      %v730 = vsub.s32 3, %v729
      %v731 = vrot.slane %v551, %v730
      %v732 = vlaneseq
      %v733 = vshrl.u32 %v732, 7
      %v734 = vsub.s32 3, %v733
      %v735 = vrot.slane %v552, %v734
      %v736 = vlaneseq
      %v737 = vshrl.u32 %v736, 7
      %v738 = vsub.s32 3, %v737
      %v739 = vrot.slane %v553, %v738
      %v740 = vlaneseq
      %v741 = vshrl.u32 %v740, 7
      %v742 = vsub.s32 3, %v741
      %v743 = vrot.slane %v554, %v742
      %v744 = vlaneseq
      %v745 = vshrl.u32 %v744, 7
      %v746 = vsub.s32 3, %v745
      %v747 = vrot.slane %v555, %v746
      %v748 = vlaneseq
      %v749 = vshrl.u32 %v748, 7
      %v750 = vsub.s32 3, %v749
      %v751 = vrot.slane %v556, %v750
      %v752 = vlaneseq
      %v753 = vshrl.u32 %v752, 7
      %v754 = vsub.s32 3, %v753
      %v755 = vrot.slane %v557, %v754
      %v756 = vmul.f32 %v722, %v727
      %v757 = vmul.f32 %v722, %v731
      %v758 = vmul.f32 %v722, %v735
      %v759 = vmul.f32 %v722, %v739
      %v760 = vmul.f32 %v722, %v743
      %v761 = vmul.f32 %v722, %v747
      %v762 = vmul.f32 %v722, %v751
      %v763 = vmul.f32 %v722, %v755
      %v764 = vadd.f32 %v712, %v756
      %v765 = vadd.f32 %v713, %v757
      %v766 = vadd.f32 %v714, %v758
      %v767 = vadd.f32 %v715, %v759
      %v768 = vadd.f32 %v716, %v760
      %v769 = vadd.f32 %v717, %v761
      %v770 = vadd.f32 %v718, %v762
      %v771 = vadd.f32 %v719, %v763
      %772 = vset.pattern.permute.xlu0 4
      %773 = vperm.xlu0 %772, %v382
      %v774 = vpop.permute.xlu0 %773
      %v776 = vlaneseq
      %v777 = vshrl.u32 %v776, 7
      %v778 = vsub.s32 4, %v777
      %v779 = vrot.slane %v550, %v778
      %v780 = vlaneseq
      %v781 = vshrl.u32 %v780, 7
      %v782 = vsub.s32 4, %v781
      %v783 = vrot.slane %v551, %v782
      %v784 = vlaneseq
      %v785 = vshrl.u32 %v784, 7
      %v786 = vsub.s32 4, %v785
      %v787 = vrot.slane %v552, %v786
      %v788 = vlaneseq
      %v789 = vshrl.u32 %v788, 7
      %v790 = vsub.s32 4, %v789
      %v791 = vrot.slane %v553, %v790
      %v792 = vlaneseq
      %v793 = vshrl.u32 %v792, 7
      %v794 = vsub.s32 4, %v793
      %v795 = vrot.slane %v554, %v794
      %v796 = vlaneseq
      %v797 = vshrl.u32 %v796, 7
      %v798 = vsub.s32 4, %v797
      %v799 = vrot.slane %v555, %v798
      %v800 = vlaneseq
      %v801 = vshrl.u32 %v800, 7
      %v802 = vsub.s32 4, %v801
      %v803 = vrot.slane %v556, %v802
      %v804 = vlaneseq
      %v805 = vshrl.u32 %v804, 7
      %v806 = vsub.s32 4, %v805
      %v807 = vrot.slane %v557, %v806
      %v808 = vmul.f32 %v774, %v779
      %v809 = vmul.f32 %v774, %v783
      %v810 = vmul.f32 %v774, %v787
      %v811 = vmul.f32 %v774, %v791
      %v812 = vmul.f32 %v774, %v795
      %v813 = vmul.f32 %v774, %v799
      %v814 = vmul.f32 %v774, %v803
      %v815 = vmul.f32 %v774, %v807
      %v816 = vadd.f32 %v764, %v808
      %v817 = vadd.f32 %v765, %v809
      %v818 = vadd.f32 %v766, %v810
      %v819 = vadd.f32 %v767, %v811
      %v820 = vadd.f32 %v768, %v812
      %v821 = vadd.f32 %v769, %v813
      %v822 = vadd.f32 %v770, %v814
      %v823 = vadd.f32 %v771, %v815
      %824 = vset.pattern.permute.xlu0 5
      %825 = vperm.xlu0 %824, %v382
      %v826 = vpop.permute.xlu0 %825
      %v828 = vlaneseq
      %v829 = vshrl.u32 %v828, 7
      %v830 = vsub.s32 5, %v829
      %v831 = vrot.slane %v550, %v830
      %v832 = vlaneseq
      %v833 = vshrl.u32 %v832, 7
      %v834 = vsub.s32 5, %v833
      %v835 = vrot.slane %v551, %v834
      %v836 = vlaneseq
      %v837 = vshrl.u32 %v836, 7
      %v838 = vsub.s32 5, %v837
      %v839 = vrot.slane %v552, %v838
      %v840 = vlaneseq
      %v841 = vshrl.u32 %v840, 7
      %v842 = vsub.s32 5, %v841
      %v843 = vrot.slane %v553, %v842
      %v844 = vlaneseq
      %v845 = vshrl.u32 %v844, 7
      %v846 = vsub.s32 5, %v845
      %v847 = vrot.slane %v554, %v846
      %v848 = vlaneseq
      %v849 = vshrl.u32 %v848, 7
      %v850 = vsub.s32 5, %v849
      %v851 = vrot.slane %v555, %v850
      %v852 = vlaneseq
      %v853 = vshrl.u32 %v852, 7
      %v854 = vsub.s32 5, %v853
      %v855 = vrot.slane %v556, %v854
      %v856 = vlaneseq
      %v857 = vshrl.u32 %v856, 7
      %v858 = vsub.s32 5, %v857
      %v859 = vrot.slane %v557, %v858
      %v860 = vmul.f32 %v826, %v831
      %v861 = vmul.f32 %v826, %v835
      %v862 = vmul.f32 %v826, %v839
      %v863 = vmul.f32 %v826, %v843
      %v864 = vmul.f32 %v826, %v847
      %v865 = vmul.f32 %v826, %v851
      %v866 = vmul.f32 %v826, %v855
      %v867 = vmul.f32 %v826, %v859
      %v868 = vadd.f32 %v816, %v860
      %v869 = vadd.f32 %v817, %v861
      %v870 = vadd.f32 %v818, %v862
      %v871 = vadd.f32 %v819, %v863
      %v872 = vadd.f32 %v820, %v864
      %v873 = vadd.f32 %v821, %v865
      %v874 = vadd.f32 %v822, %v866
      %v875 = vadd.f32 %v823, %v867
      %876 = vset.pattern.permute.xlu0 6
      %877 = vperm.xlu0 %876, %v382
      %v878 = vpop.permute.xlu0 %877
      %v880 = vlaneseq
      %v881 = vshrl.u32 %v880, 7
      %v882 = vsub.s32 6, %v881
      %v883 = vrot.slane %v550, %v882
      %v884 = vlaneseq
      %v885 = vshrl.u32 %v884, 7
      %v886 = vsub.s32 6, %v885
      %v887 = vrot.slane %v551, %v886
      %v888 = vlaneseq
      %v889 = vshrl.u32 %v888, 7
      %v890 = vsub.s32 6, %v889
      %v891 = vrot.slane %v552, %v890
      %v892 = vlaneseq
      %v893 = vshrl.u32 %v892, 7
      %v894 = vsub.s32 6, %v893
      %v895 = vrot.slane %v553, %v894
      %v896 = vlaneseq
      %v897 = vshrl.u32 %v896, 7
      %v898 = vsub.s32 6, %v897
      %v899 = vrot.slane %v554, %v898
      %v900 = vlaneseq
      %v901 = vshrl.u32 %v900, 7
      %v902 = vsub.s32 6, %v901
      %v903 = vrot.slane %v555, %v902
      %v904 = vlaneseq
      %v905 = vshrl.u32 %v904, 7
      %v906 = vsub.s32 6, %v905
      %v907 = vrot.slane %v556, %v906
      %v908 = vlaneseq
      %v909 = vshrl.u32 %v908, 7
      %v910 = vsub.s32 6, %v909
      %v911 = vrot.slane %v557, %v910
      %v912 = vmul.f32 %v878, %v883
      %v913 = vmul.f32 %v878, %v887
      %v914 = vmul.f32 %v878, %v891
      %v915 = vmul.f32 %v878, %v895
      %v916 = vmul.f32 %v878, %v899
      %v917 = vmul.f32 %v878, %v903
      %v918 = vmul.f32 %v878, %v907
      %v919 = vmul.f32 %v878, %v911
      %v920 = vadd.f32 %v868, %v912
      %v921 = vadd.f32 %v869, %v913
      %v922 = vadd.f32 %v870, %v914
      %v923 = vadd.f32 %v871, %v915
      %v924 = vadd.f32 %v872, %v916
      %v925 = vadd.f32 %v873, %v917
      %v926 = vadd.f32 %v874, %v918
      %v927 = vadd.f32 %v875, %v919
      %928 = vset.pattern.permute.xlu0 7
      %929 = vperm.xlu0 %928, %v382
      %v930 = vpop.permute.xlu0 %929
      %v932 = vlaneseq
      %v933 = vshrl.u32 %v932, 7
      %v934 = vsub.s32 7, %v933
      %v935 = vrot.slane %v550, %v934
      %v936 = vlaneseq
      %v937 = vshrl.u32 %v936, 7
      %v938 = vsub.s32 7, %v937
      %v939 = vrot.slane %v551, %v938
      %v940 = vlaneseq
      %v941 = vshrl.u32 %v940, 7
      %v942 = vsub.s32 7, %v941
      %v943 = vrot.slane %v552, %v942
      %v944 = vlaneseq
      %v945 = vshrl.u32 %v944, 7
      %v946 = vsub.s32 7, %v945
      %v947 = vrot.slane %v553, %v946
      %v948 = vlaneseq
      %v949 = vshrl.u32 %v948, 7
      %v950 = vsub.s32 7, %v949
      %v951 = vrot.slane %v554, %v950
      %v952 = vlaneseq
      %v953 = vshrl.u32 %v952, 7
      %v954 = vsub.s32 7, %v953
      %v955 = vrot.slane %v555, %v954
      %v956 = vlaneseq
      %v957 = vshrl.u32 %v956, 7
      %v958 = vsub.s32 7, %v957
      %v959 = vrot.slane %v556, %v958
      %v960 = vlaneseq
      %v961 = vshrl.u32 %v960, 7
      %v962 = vsub.s32 7, %v961
      %v963 = vrot.slane %v557, %v962
      %v964 = vmul.f32 %v930, %v935
      %v965 = vmul.f32 %v930, %v939
      %v966 = vmul.f32 %v930, %v943
      %v967 = vmul.f32 %v930, %v947
      %v968 = vmul.f32 %v930, %v951
      %v969 = vmul.f32 %v930, %v955
      %v970 = vmul.f32 %v930, %v959
      %v971 = vmul.f32 %v930, %v963
      %v972 = vadd.f32 %v920, %v964
      %v973 = vadd.f32 %v921, %v965
      %v974 = vadd.f32 %v922, %v966
      %v975 = vadd.f32 %v923, %v967
      %v976 = vadd.f32 %v924, %v968
      %v977 = vadd.f32 %v925, %v969
      %v978 = vadd.f32 %v926, %v970
      %v979 = vadd.f32 %v927, %v971
      %v980 = vmax.f32 %v972, 0.0
      %v981 = vmax.f32 %v973, 0.0
      %v982 = vmax.f32 %v974, 0.0
      %v983 = vmax.f32 %v975, 0.0
      %v984 = vmax.f32 %v976, 0.0
      %v985 = vmax.f32 %v977, 0.0
      %v986 = vmax.f32 %v978, 0.0
      %v987 = vmax.f32 %v979, 0.0
      %989 = vset.pattern.permute.xlu0 0
      %990 = vperm.xlu0 %989, %v386
      %v991 = vpop.permute.xlu0 %990
      %994 = vset.pattern.permute.xlu0 0
      %995 = vperm.xlu0 %994, %v387
      %v996 = vpop.permute.xlu0 %995
      %999 = vset.pattern.permute.xlu0 0
      %1000 = vperm.xlu0 %999, %v384
      %v1001 = vpop.permute.xlu0 %1000
      %1004 = vset.pattern.permute.xlu0 0
      %1005 = vperm.xlu0 %1004, %v385
      %v1006 = vpop.permute.xlu0 %1005
      %v1008 = vlaneseq
      %v1009 = vshrl.u32 %v1008, 7
      %v1010 = vsub.s32 0, %v1009
      %v1011 = vrot.slane %v980, %v1010
      %v1012 = vlaneseq
      %v1013 = vshrl.u32 %v1012, 7
      %v1014 = vsub.s32 0, %v1013
      %v1015 = vrot.slane %v981, %v1014
      %v1016 = vlaneseq
      %v1017 = vshrl.u32 %v1016, 7
      %v1018 = vsub.s32 0, %v1017
      %v1019 = vrot.slane %v982, %v1018
      %v1020 = vlaneseq
      %v1021 = vshrl.u32 %v1020, 7
      %v1022 = vsub.s32 0, %v1021
      %v1023 = vrot.slane %v983, %v1022
      %v1024 = vlaneseq
      %v1025 = vshrl.u32 %v1024, 7
      %v1026 = vsub.s32 0, %v1025
      %v1027 = vrot.slane %v984, %v1026
      %v1028 = vlaneseq
      %v1029 = vshrl.u32 %v1028, 7
      %v1030 = vsub.s32 0, %v1029
      %v1031 = vrot.slane %v985, %v1030
      %v1032 = vlaneseq
      %v1033 = vshrl.u32 %v1032, 7
      %v1034 = vsub.s32 0, %v1033
      %v1035 = vrot.slane %v986, %v1034
      %v1036 = vlaneseq
      %v1037 = vshrl.u32 %v1036, 7
      %v1038 = vsub.s32 0, %v1037
      %v1039 = vrot.slane %v987, %v1038
      %v1040 = vmul.f32 %v1001, %v1011
      %v1041 = vmul.f32 %v1006, %v1011
      %v1042 = vmul.f32 %v1001, %v1015
      %v1043 = vmul.f32 %v1006, %v1015
      %v1044 = vmul.f32 %v1001, %v1019
      %v1045 = vmul.f32 %v1006, %v1019
      %v1046 = vmul.f32 %v1001, %v1023
      %v1047 = vmul.f32 %v1006, %v1023
      %v1048 = vmul.f32 %v1001, %v1027
      %v1049 = vmul.f32 %v1006, %v1027
      %v1050 = vmul.f32 %v1001, %v1031
      %v1051 = vmul.f32 %v1006, %v1031
      %v1052 = vmul.f32 %v1001, %v1035
      %v1053 = vmul.f32 %v1006, %v1035
      %v1054 = vmul.f32 %v1001, %v1039
      %v1055 = vmul.f32 %v1006, %v1039
      %v1056 = vadd.f32 %v991, %v1040
      %v1057 = vadd.f32 %v996, %v1041
      %v1058 = vadd.f32 %v991, %v1042
      %v1059 = vadd.f32 %v996, %v1043
      %v1060 = vadd.f32 %v991, %v1044
      %v1061 = vadd.f32 %v996, %v1045
      %v1062 = vadd.f32 %v991, %v1046
      %v1063 = vadd.f32 %v996, %v1047
      %v1064 = vadd.f32 %v991, %v1048
      %v1065 = vadd.f32 %v996, %v1049
      %v1066 = vadd.f32 %v991, %v1050
      %v1067 = vadd.f32 %v996, %v1051
      %v1068 = vadd.f32 %v991, %v1052
      %v1069 = vadd.f32 %v996, %v1053
      %v1070 = vadd.f32 %v991, %v1054
      %v1071 = vadd.f32 %v996, %v1055
      %1072 = vset.pattern.permute.xlu0 1
      %1073 = vperm.xlu0 %1072, %v384
      %v1074 = vpop.permute.xlu0 %1073
      %1076 = vset.pattern.permute.xlu0 1
      %1077 = vperm.xlu0 %1076, %v385
      %v1078 = vpop.permute.xlu0 %1077
      %v1080 = vlaneseq
      %v1081 = vshrl.u32 %v1080, 7
      %v1082 = vsub.s32 1, %v1081
      %v1083 = vrot.slane %v980, %v1082
      %v1084 = vlaneseq
      %v1085 = vshrl.u32 %v1084, 7
      %v1086 = vsub.s32 1, %v1085
      %v1087 = vrot.slane %v981, %v1086
      %v1088 = vlaneseq
      %v1089 = vshrl.u32 %v1088, 7
      %v1090 = vsub.s32 1, %v1089
      %v1091 = vrot.slane %v982, %v1090
      %v1092 = vlaneseq
      %v1093 = vshrl.u32 %v1092, 7
      %v1094 = vsub.s32 1, %v1093
      %v1095 = vrot.slane %v983, %v1094
      %v1096 = vlaneseq
      %v1097 = vshrl.u32 %v1096, 7
      %v1098 = vsub.s32 1, %v1097
      %v1099 = vrot.slane %v984, %v1098
      %v1100 = vlaneseq
      %v1101 = vshrl.u32 %v1100, 7
      %v1102 = vsub.s32 1, %v1101
      %v1103 = vrot.slane %v985, %v1102
      %v1104 = vlaneseq
      %v1105 = vshrl.u32 %v1104, 7
      %v1106 = vsub.s32 1, %v1105
      %v1107 = vrot.slane %v986, %v1106
      %v1108 = vlaneseq
      %v1109 = vshrl.u32 %v1108, 7
      %v1110 = vsub.s32 1, %v1109
      %v1111 = vrot.slane %v987, %v1110
      %v1112 = vmul.f32 %v1074, %v1083
      %v1113 = vmul.f32 %v1078, %v1083
      %v1114 = vmul.f32 %v1074, %v1087
      %v1115 = vmul.f32 %v1078, %v1087
      %v1116 = vmul.f32 %v1074, %v1091
      %v1117 = vmul.f32 %v1078, %v1091
      %v1118 = vmul.f32 %v1074, %v1095
      %v1119 = vmul.f32 %v1078, %v1095
      %v1120 = vmul.f32 %v1074, %v1099
      %v1121 = vmul.f32 %v1078, %v1099
      %v1122 = vmul.f32 %v1074, %v1103
      %v1123 = vmul.f32 %v1078, %v1103
      %v1124 = vmul.f32 %v1074, %v1107
      %v1125 = vmul.f32 %v1078, %v1107
      %v1126 = vmul.f32 %v1074, %v1111
      %v1127 = vmul.f32 %v1078, %v1111
      %v1128 = vadd.f32 %v1056, %v1112
      %v1129 = vadd.f32 %v1057, %v1113
      %v1130 = vadd.f32 %v1058, %v1114
      %v1131 = vadd.f32 %v1059, %v1115
      %v1132 = vadd.f32 %v1060, %v1116
      %v1133 = vadd.f32 %v1061, %v1117
      %v1134 = vadd.f32 %v1062, %v1118
      %v1135 = vadd.f32 %v1063, %v1119
      %v1136 = vadd.f32 %v1064, %v1120
      %v1137 = vadd.f32 %v1065, %v1121
      %v1138 = vadd.f32 %v1066, %v1122
      %v1139 = vadd.f32 %v1067, %v1123
      %v1140 = vadd.f32 %v1068, %v1124
      %v1141 = vadd.f32 %v1069, %v1125
      %v1142 = vadd.f32 %v1070, %v1126
      %v1143 = vadd.f32 %v1071, %v1127
      %1144 = vset.pattern.permute.xlu0 2
      %1145 = vperm.xlu0 %1144, %v384
      %v1146 = vpop.permute.xlu0 %1145
      %1148 = vset.pattern.permute.xlu0 2
      %1149 = vperm.xlu0 %1148, %v385
      %v1150 = vpop.permute.xlu0 %1149
      %v1152 = vlaneseq
      %v1153 = vshrl.u32 %v1152, 7
      %v1154 = vsub.s32 2, %v1153
      %v1155 = vrot.slane %v980, %v1154
      %v1156 = vlaneseq
      %v1157 = vshrl.u32 %v1156, 7
      %v1158 = vsub.s32 2, %v1157
      %v1159 = vrot.slane %v981, %v1158
      %v1160 = vlaneseq
      %v1161 = vshrl.u32 %v1160, 7
      %v1162 = vsub.s32 2, %v1161
      %v1163 = vrot.slane %v982, %v1162
      %v1164 = vlaneseq
      %v1165 = vshrl.u32 %v1164, 7
      %v1166 = vsub.s32 2, %v1165
      %v1167 = vrot.slane %v983, %v1166
      %v1168 = vlaneseq
      %v1169 = vshrl.u32 %v1168, 7
      %v1170 = vsub.s32 2, %v1169
      %v1171 = vrot.slane %v984, %v1170
      %v1172 = vlaneseq
      %v1173 = vshrl.u32 %v1172, 7
      %v1174 = vsub.s32 2, %v1173
      %v1175 = vrot.slane %v985, %v1174
      %v1176 = vlaneseq
      %v1177 = vshrl.u32 %v1176, 7
      %v1178 = vsub.s32 2, %v1177
      %v1179 = vrot.slane %v986, %v1178
      %v1180 = vlaneseq
      %v1181 = vshrl.u32 %v1180, 7
      %v1182 = vsub.s32 2, %v1181
      %v1183 = vrot.slane %v987, %v1182
      %v1184 = vmul.f32 %v1146, %v1155
      %v1185 = vmul.f32 %v1150, %v1155
      %v1186 = vmul.f32 %v1146, %v1159
      %v1187 = vmul.f32 %v1150, %v1159
      %v1188 = vmul.f32 %v1146, %v1163
      %v1189 = vmul.f32 %v1150, %v1163
      %v1190 = vmul.f32 %v1146, %v1167
      %v1191 = vmul.f32 %v1150, %v1167
      %v1192 = vmul.f32 %v1146, %v1171
      %v1193 = vmul.f32 %v1150, %v1171
      %v1194 = vmul.f32 %v1146, %v1175
      %v1195 = vmul.f32 %v1150, %v1175
      %v1196 = vmul.f32 %v1146, %v1179
      %v1197 = vmul.f32 %v1150, %v1179
      %v1198 = vmul.f32 %v1146, %v1183
      %v1199 = vmul.f32 %v1150, %v1183
      %v1200 = vadd.f32 %v1128, %v1184
      %v1201 = vadd.f32 %v1129, %v1185
      %v1202 = vadd.f32 %v1130, %v1186
      %v1203 = vadd.f32 %v1131, %v1187
      %v1204 = vadd.f32 %v1132, %v1188
      %v1205 = vadd.f32 %v1133, %v1189
      %v1206 = vadd.f32 %v1134, %v1190
      %v1207 = vadd.f32 %v1135, %v1191
      %v1208 = vadd.f32 %v1136, %v1192
      %v1209 = vadd.f32 %v1137, %v1193
      %v1210 = vadd.f32 %v1138, %v1194
      %v1211 = vadd.f32 %v1139, %v1195
      %v1212 = vadd.f32 %v1140, %v1196
      %v1213 = vadd.f32 %v1141, %v1197
      %v1214 = vadd.f32 %v1142, %v1198
      %v1215 = vadd.f32 %v1143, %v1199
      %1216 = vset.pattern.permute.xlu0 3
      %1217 = vperm.xlu0 %1216, %v384
      %v1218 = vpop.permute.xlu0 %1217
      %1220 = vset.pattern.permute.xlu0 3
      %1221 = vperm.xlu0 %1220, %v385
      %v1222 = vpop.permute.xlu0 %1221
      %v1224 = vlaneseq
      %v1225 = vshrl.u32 %v1224, 7
      %v1226 = vsub.s32 3, %v1225
      %v1227 = vrot.slane %v980, %v1226
      %v1228 = vlaneseq
      %v1229 = vshrl.u32 %v1228, 7
      %v1230 = vsub.s32 3, %v1229
      %v1231 = vrot.slane %v981, %v1230
      %v1232 = vlaneseq
      %v1233 = vshrl.u32 %v1232, 7
      %v1234 = vsub.s32 3, %v1233
      %v1235 = vrot.slane %v982, %v1234
      %v1236 = vlaneseq
      %v1237 = vshrl.u32 %v1236, 7
      %v1238 = vsub.s32 3, %v1237
      %v1239 = vrot.slane %v983, %v1238
      %v1240 = vlaneseq
      %v1241 = vshrl.u32 %v1240, 7
      %v1242 = vsub.s32 3, %v1241
      %v1243 = vrot.slane %v984, %v1242
      %v1244 = vlaneseq
      %v1245 = vshrl.u32 %v1244, 7
      %v1246 = vsub.s32 3, %v1245
      %v1247 = vrot.slane %v985, %v1246
      %v1248 = vlaneseq
      %v1249 = vshrl.u32 %v1248, 7
      %v1250 = vsub.s32 3, %v1249
      %v1251 = vrot.slane %v986, %v1250
      %v1252 = vlaneseq
      %v1253 = vshrl.u32 %v1252, 7
      %v1254 = vsub.s32 3, %v1253
      %v1255 = vrot.slane %v987, %v1254
      %v1256 = vmul.f32 %v1218, %v1227
      %v1257 = vmul.f32 %v1222, %v1227
      %v1258 = vmul.f32 %v1218, %v1231
      %v1259 = vmul.f32 %v1222, %v1231
      %v1260 = vmul.f32 %v1218, %v1235
      %v1261 = vmul.f32 %v1222, %v1235
      %v1262 = vmul.f32 %v1218, %v1239
      %v1263 = vmul.f32 %v1222, %v1239
      %v1264 = vmul.f32 %v1218, %v1243
      %v1265 = vmul.f32 %v1222, %v1243
      %v1266 = vmul.f32 %v1218, %v1247
      %v1267 = vmul.f32 %v1222, %v1247
      %v1268 = vmul.f32 %v1218, %v1251
      %v1269 = vmul.f32 %v1222, %v1251
      %v1270 = vmul.f32 %v1218, %v1255
      %v1271 = vmul.f32 %v1222, %v1255
      %v1272 = vadd.f32 %v1200, %v1256
      %v1273 = vadd.f32 %v1201, %v1257
      %v1274 = vadd.f32 %v1202, %v1258
      %v1275 = vadd.f32 %v1203, %v1259
      %v1276 = vadd.f32 %v1204, %v1260
      %v1277 = vadd.f32 %v1205, %v1261
      %v1278 = vadd.f32 %v1206, %v1262
      %v1279 = vadd.f32 %v1207, %v1263
      %v1280 = vadd.f32 %v1208, %v1264
      %v1281 = vadd.f32 %v1209, %v1265
      %v1282 = vadd.f32 %v1210, %v1266
      %v1283 = vadd.f32 %v1211, %v1267
      %v1284 = vadd.f32 %v1212, %v1268
      %v1285 = vadd.f32 %v1213, %v1269
      %v1286 = vadd.f32 %v1214, %v1270
      %v1287 = vadd.f32 %v1215, %v1271
      %1288 = vset.pattern.permute.xlu0 4
      %1289 = vperm.xlu0 %1288, %v384
      %v1290 = vpop.permute.xlu0 %1289
      %1292 = vset.pattern.permute.xlu0 4
      %1293 = vperm.xlu0 %1292, %v385
      %v1294 = vpop.permute.xlu0 %1293
      %v1296 = vlaneseq
      %v1297 = vshrl.u32 %v1296, 7
      %v1298 = vsub.s32 4, %v1297
      %v1299 = vrot.slane %v980, %v1298
      %v1300 = vlaneseq
      %v1301 = vshrl.u32 %v1300, 7
      %v1302 = vsub.s32 4, %v1301
      %v1303 = vrot.slane %v981, %v1302
      %v1304 = vlaneseq
      %v1305 = vshrl.u32 %v1304, 7
      %v1306 = vsub.s32 4, %v1305
      %v1307 = vrot.slane %v982, %v1306
      %v1308 = vlaneseq
      %v1309 = vshrl.u32 %v1308, 7
      %v1310 = vsub.s32 4, %v1309
      %v1311 = vrot.slane %v983, %v1310
      %v1312 = vlaneseq
      %v1313 = vshrl.u32 %v1312, 7
      %v1314 = vsub.s32 4, %v1313
      %v1315 = vrot.slane %v984, %v1314
      %v1316 = vlaneseq
      %v1317 = vshrl.u32 %v1316, 7
      %v1318 = vsub.s32 4, %v1317
      %v1319 = vrot.slane %v985, %v1318
      %v1320 = vlaneseq
      %v1321 = vshrl.u32 %v1320, 7
      %v1322 = vsub.s32 4, %v1321
      %v1323 = vrot.slane %v986, %v1322
      %v1324 = vlaneseq
      %v1325 = vshrl.u32 %v1324, 7
      %v1326 = vsub.s32 4, %v1325
      %v1327 = vrot.slane %v987, %v1326
      %v1328 = vmul.f32 %v1290, %v1299
      %v1329 = vmul.f32 %v1294, %v1299
      %v1330 = vmul.f32 %v1290, %v1303
      %v1331 = vmul.f32 %v1294, %v1303
      %v1332 = vmul.f32 %v1290, %v1307
      %v1333 = vmul.f32 %v1294, %v1307
      %v1334 = vmul.f32 %v1290, %v1311
      %v1335 = vmul.f32 %v1294, %v1311
      %v1336 = vmul.f32 %v1290, %v1315
      %v1337 = vmul.f32 %v1294, %v1315
      %v1338 = vmul.f32 %v1290, %v1319
      %v1339 = vmul.f32 %v1294, %v1319
      %v1340 = vmul.f32 %v1290, %v1323
      %v1341 = vmul.f32 %v1294, %v1323
      %v1342 = vmul.f32 %v1290, %v1327
      %v1343 = vmul.f32 %v1294, %v1327
      %v1344 = vadd.f32 %v1272, %v1328
      %v1345 = vadd.f32 %v1273, %v1329
      %v1346 = vadd.f32 %v1274, %v1330
      %v1347 = vadd.f32 %v1275, %v1331
      %v1348 = vadd.f32 %v1276, %v1332
      %v1349 = vadd.f32 %v1277, %v1333
      %v1350 = vadd.f32 %v1278, %v1334
      %v1351 = vadd.f32 %v1279, %v1335
      %v1352 = vadd.f32 %v1280, %v1336
      %v1353 = vadd.f32 %v1281, %v1337
      %v1354 = vadd.f32 %v1282, %v1338
      %v1355 = vadd.f32 %v1283, %v1339
      %v1356 = vadd.f32 %v1284, %v1340
      %v1357 = vadd.f32 %v1285, %v1341
      %v1358 = vadd.f32 %v1286, %v1342
      %v1359 = vadd.f32 %v1287, %v1343
      %1360 = vset.pattern.permute.xlu0 5
      %1361 = vperm.xlu0 %1360, %v384
      %v1362 = vpop.permute.xlu0 %1361
      %1364 = vset.pattern.permute.xlu0 5
      %1365 = vperm.xlu0 %1364, %v385
      %v1366 = vpop.permute.xlu0 %1365
      %v1368 = vlaneseq
      %v1369 = vshrl.u32 %v1368, 7
      %v1370 = vsub.s32 5, %v1369
      %v1371 = vrot.slane %v980, %v1370
      %v1372 = vlaneseq
      %v1373 = vshrl.u32 %v1372, 7
      %v1374 = vsub.s32 5, %v1373
      %v1375 = vrot.slane %v981, %v1374
      %v1376 = vlaneseq
      %v1377 = vshrl.u32 %v1376, 7
      %v1378 = vsub.s32 5, %v1377
      %v1379 = vrot.slane %v982, %v1378
      %v1380 = vlaneseq
      %v1381 = vshrl.u32 %v1380, 7
      %v1382 = vsub.s32 5, %v1381
      %v1383 = vrot.slane %v983, %v1382
      %v1384 = vlaneseq
      %v1385 = vshrl.u32 %v1384, 7
      %v1386 = vsub.s32 5, %v1385
      %v1387 = vrot.slane %v984, %v1386
      %v1388 = vlaneseq
      %v1389 = vshrl.u32 %v1388, 7
      %v1390 = vsub.s32 5, %v1389
      %v1391 = vrot.slane %v985, %v1390
      %v1392 = vlaneseq
      %v1393 = vshrl.u32 %v1392, 7
      %v1394 = vsub.s32 5, %v1393
      %v1395 = vrot.slane %v986, %v1394
      %v1396 = vlaneseq
      %v1397 = vshrl.u32 %v1396, 7
      %v1398 = vsub.s32 5, %v1397
      %v1399 = vrot.slane %v987, %v1398
      %v1400 = vmul.f32 %v1362, %v1371
      %v1401 = vmul.f32 %v1366, %v1371
      %v1402 = vmul.f32 %v1362, %v1375
      %v1403 = vmul.f32 %v1366, %v1375
      %v1404 = vmul.f32 %v1362, %v1379
      %v1405 = vmul.f32 %v1366, %v1379
      %v1406 = vmul.f32 %v1362, %v1383
      %v1407 = vmul.f32 %v1366, %v1383
      %v1408 = vmul.f32 %v1362, %v1387
      %v1409 = vmul.f32 %v1366, %v1387
      %v1410 = vmul.f32 %v1362, %v1391
      %v1411 = vmul.f32 %v1366, %v1391
      %v1412 = vmul.f32 %v1362, %v1395
      %v1413 = vmul.f32 %v1366, %v1395
      %v1414 = vmul.f32 %v1362, %v1399
      %v1415 = vmul.f32 %v1366, %v1399
      %v1416 = vadd.f32 %v1344, %v1400
      %v1417 = vadd.f32 %v1345, %v1401
      %v1418 = vadd.f32 %v1346, %v1402
      %v1419 = vadd.f32 %v1347, %v1403
      %v1420 = vadd.f32 %v1348, %v1404
      %v1421 = vadd.f32 %v1349, %v1405
      %v1422 = vadd.f32 %v1350, %v1406
      %v1423 = vadd.f32 %v1351, %v1407
      %v1424 = vadd.f32 %v1352, %v1408
      %v1425 = vadd.f32 %v1353, %v1409
      %v1426 = vadd.f32 %v1354, %v1410
      %v1427 = vadd.f32 %v1355, %v1411
      %v1428 = vadd.f32 %v1356, %v1412
      %v1429 = vadd.f32 %v1357, %v1413
      %v1430 = vadd.f32 %v1358, %v1414
      %v1431 = vadd.f32 %v1359, %v1415
      %1432 = vset.pattern.permute.xlu0 6
      %1433 = vperm.xlu0 %1432, %v384
      %v1434 = vpop.permute.xlu0 %1433
      %1436 = vset.pattern.permute.xlu0 6
      %1437 = vperm.xlu0 %1436, %v385
      %v1438 = vpop.permute.xlu0 %1437
      %v1440 = vlaneseq
      %v1441 = vshrl.u32 %v1440, 7
      %v1442 = vsub.s32 6, %v1441
      %v1443 = vrot.slane %v980, %v1442
      %v1444 = vlaneseq
      %v1445 = vshrl.u32 %v1444, 7
      %v1446 = vsub.s32 6, %v1445
      %v1447 = vrot.slane %v981, %v1446
      %v1448 = vlaneseq
      %v1449 = vshrl.u32 %v1448, 7
      %v1450 = vsub.s32 6, %v1449
      %v1451 = vrot.slane %v982, %v1450
      %v1452 = vlaneseq
      %v1453 = vshrl.u32 %v1452, 7
      %v1454 = vsub.s32 6, %v1453
      %v1455 = vrot.slane %v983, %v1454
      %v1456 = vlaneseq
      %v1457 = vshrl.u32 %v1456, 7
      %v1458 = vsub.s32 6, %v1457
      %v1459 = vrot.slane %v984, %v1458
      %v1460 = vlaneseq
      %v1461 = vshrl.u32 %v1460, 7
      %v1462 = vsub.s32 6, %v1461
      %v1463 = vrot.slane %v985, %v1462
      %v1464 = vlaneseq
      %v1465 = vshrl.u32 %v1464, 7
      %v1466 = vsub.s32 6, %v1465
      %v1467 = vrot.slane %v986, %v1466
      %v1468 = vlaneseq
      %v1469 = vshrl.u32 %v1468, 7
      %v1470 = vsub.s32 6, %v1469
      %v1471 = vrot.slane %v987, %v1470
      %v1472 = vmul.f32 %v1434, %v1443
      %v1473 = vmul.f32 %v1438, %v1443
      %v1474 = vmul.f32 %v1434, %v1447
      %v1475 = vmul.f32 %v1438, %v1447
      %v1476 = vmul.f32 %v1434, %v1451
      %v1477 = vmul.f32 %v1438, %v1451
      %v1478 = vmul.f32 %v1434, %v1455
      %v1479 = vmul.f32 %v1438, %v1455
      %v1480 = vmul.f32 %v1434, %v1459
      %v1481 = vmul.f32 %v1438, %v1459
      %v1482 = vmul.f32 %v1434, %v1463
      %v1483 = vmul.f32 %v1438, %v1463
      %v1484 = vmul.f32 %v1434, %v1467
      %v1485 = vmul.f32 %v1438, %v1467
      %v1486 = vmul.f32 %v1434, %v1471
      %v1487 = vmul.f32 %v1438, %v1471
      %v1488 = vadd.f32 %v1416, %v1472
      %v1489 = vadd.f32 %v1417, %v1473
      %v1490 = vadd.f32 %v1418, %v1474
      %v1491 = vadd.f32 %v1419, %v1475
      %v1492 = vadd.f32 %v1420, %v1476
      %v1493 = vadd.f32 %v1421, %v1477
      %v1494 = vadd.f32 %v1422, %v1478
      %v1495 = vadd.f32 %v1423, %v1479
      %v1496 = vadd.f32 %v1424, %v1480
      %v1497 = vadd.f32 %v1425, %v1481
      %v1498 = vadd.f32 %v1426, %v1482
      %v1499 = vadd.f32 %v1427, %v1483
      %v1500 = vadd.f32 %v1428, %v1484
      %v1501 = vadd.f32 %v1429, %v1485
      %v1502 = vadd.f32 %v1430, %v1486
      %v1503 = vadd.f32 %v1431, %v1487
      %1504 = vset.pattern.permute.xlu0 7
      %1505 = vperm.xlu0 %1504, %v384
      %v1506 = vpop.permute.xlu0 %1505
      %1508 = vset.pattern.permute.xlu0 7
      %1509 = vperm.xlu0 %1508, %v385
      %v1510 = vpop.permute.xlu0 %1509
      %v1512 = vlaneseq
      %v1513 = vshrl.u32 %v1512, 7
      %v1514 = vsub.s32 7, %v1513
      %v1515 = vrot.slane %v980, %v1514
      %v1516 = vlaneseq
      %v1517 = vshrl.u32 %v1516, 7
      %v1518 = vsub.s32 7, %v1517
      %v1519 = vrot.slane %v981, %v1518
      %v1520 = vlaneseq
      %v1521 = vshrl.u32 %v1520, 7
      %v1522 = vsub.s32 7, %v1521
      %v1523 = vrot.slane %v982, %v1522
      %v1524 = vlaneseq
      %v1525 = vshrl.u32 %v1524, 7
      %v1526 = vsub.s32 7, %v1525
      %v1527 = vrot.slane %v983, %v1526
      %v1528 = vlaneseq
      %v1529 = vshrl.u32 %v1528, 7
      %v1530 = vsub.s32 7, %v1529
      %v1531 = vrot.slane %v984, %v1530
      %v1532 = vlaneseq
      %v1533 = vshrl.u32 %v1532, 7
      %v1534 = vsub.s32 7, %v1533
      %v1535 = vrot.slane %v985, %v1534
      %v1536 = vlaneseq
      %v1537 = vshrl.u32 %v1536, 7
      %v1538 = vsub.s32 7, %v1537
      %v1539 = vrot.slane %v986, %v1538
      %v1540 = vlaneseq
      %v1541 = vshrl.u32 %v1540, 7
      %v1542 = vsub.s32 7, %v1541
      %v1543 = vrot.slane %v987, %v1542
      %v1544 = vmul.f32 %v1506, %v1515
      %v1545 = vmul.f32 %v1510, %v1515
      %v1546 = vmul.f32 %v1506, %v1519
      %v1547 = vmul.f32 %v1510, %v1519
      %v1548 = vmul.f32 %v1506, %v1523
      %v1549 = vmul.f32 %v1510, %v1523
      %v1550 = vmul.f32 %v1506, %v1527
      %v1551 = vmul.f32 %v1510, %v1527
      %v1552 = vmul.f32 %v1506, %v1531
      %v1553 = vmul.f32 %v1510, %v1531
      %v1554 = vmul.f32 %v1506, %v1535
      %v1555 = vmul.f32 %v1510, %v1535
      %v1556 = vmul.f32 %v1506, %v1539
      %v1557 = vmul.f32 %v1510, %v1539
      %v1558 = vmul.f32 %v1506, %v1543
      %v1559 = vmul.f32 %v1510, %v1543
      %v1560 = vadd.f32 %v1488, %v1544
      %v1561 = vadd.f32 %v1489, %v1545
      %v1562 = vadd.f32 %v1490, %v1546
      %v1563 = vadd.f32 %v1491, %v1547
      %v1564 = vadd.f32 %v1492, %v1548
      %v1565 = vadd.f32 %v1493, %v1549
      %v1566 = vadd.f32 %v1494, %v1550
      %v1567 = vadd.f32 %v1495, %v1551
      %v1568 = vadd.f32 %v1496, %v1552
      %v1569 = vadd.f32 %v1497, %v1553
      %v1570 = vadd.f32 %v1498, %v1554
      %v1571 = vadd.f32 %v1499, %v1555
      %v1572 = vadd.f32 %v1500, %v1556
      %v1573 = vadd.f32 %v1501, %v1557
      %v1574 = vadd.f32 %v1502, %v1558
      %v1575 = vadd.f32 %v1503, %v1559
      %v1576 = vmax.f32 %v1560, 0.0
      %v1577 = vmax.f32 %v1561, 0.0
      %v1578 = vmax.f32 %v1562, 0.0
      %v1579 = vmax.f32 %v1563, 0.0
      %v1580 = vmax.f32 %v1564, 0.0
      %v1581 = vmax.f32 %v1565, 0.0
      %v1582 = vmax.f32 %v1566, 0.0
      %v1583 = vmax.f32 %v1567, 0.0
      %v1584 = vmax.f32 %v1568, 0.0
      %v1585 = vmax.f32 %v1569, 0.0
      %v1586 = vmax.f32 %v1570, 0.0
      %v1587 = vmax.f32 %v1571, 0.0
      %v1588 = vmax.f32 %v1572, 0.0
      %v1589 = vmax.f32 %v1573, 0.0
      %v1590 = vmax.f32 %v1574, 0.0
      %v1591 = vmax.f32 %v1575, 0.0
      %1592 = vst [vmem:[#allocation2] sm:$0xff] %v1576
      %1593 = vst [vmem:[#allocation2 + $0x8] sm:$0xff] %v1577
      %1594 = vst [vmem:[#allocation2 + $0x10] sm:$0xff] %v1578
      %1595 = vst [vmem:[#allocation2 + $0x18] sm:$0xff] %v1579
      %1596 = vst [vmem:[#allocation2 + $0x20] sm:$0xff] %v1580
      %1597 = vst [vmem:[#allocation2 + $0x28] sm:$0xff] %v1581
      %1598 = vst [vmem:[#allocation2 + $0x30] sm:$0xff] %v1582
      %1599 = vst [vmem:[#allocation2 + $0x38] sm:$0xff] %v1583
      %1600 = vst [vmem:[#allocation2 + $0x40] sm:$0xff] %v1584
      %1601 = vst [vmem:[#allocation2 + $0x48] sm:$0xff] %v1585
      %1602 = vst [vmem:[#allocation2 + $0x50] sm:$0xff] %v1586
      %1603 = vst [vmem:[#allocation2 + $0x58] sm:$0xff] %v1587
      %1604 = vst [vmem:[#allocation2 + $0x60] sm:$0xff] %v1588
      %1605 = vst [vmem:[#allocation2 + $0x68] sm:$0xff] %v1589
      %1606 = vst [vmem:[#allocation2 + $0x70] sm:$0xff] %v1590
      %1607 = vst [vmem:[#allocation2 + $0x78] sm:$0xff] %v1591
      %v1608 = vld [vmem:[%s8] sm:$0xff]
      %v1609 = vld [vmem:[%s8 + $0x8] sm:$0xff]
      %v1610 = vld [vmem:[%s8 + $0x10] sm:$0xff]
      %v1611 = vld [vmem:[%s8 + $0x18] sm:$0xff]
      %1613 = vset.pattern.permute.xlu0 0
      %1614 = vperm.xlu0 %1613, %v1608
      %v1615 = vpop.permute.xlu0 %1614
      %1618 = vset.pattern.permute.xlu0 0
      %1619 = vperm.xlu0 %1618, %v1609
      %v1620 = vpop.permute.xlu0 %1619
      %1623 = vset.pattern.permute.xlu0 0
      %1624 = vperm.xlu0 %1623, %v1610
      %v1625 = vpop.permute.xlu0 %1624
      %1628 = vset.pattern.permute.xlu0 0
      %1629 = vperm.xlu0 %1628, %v1611
      %v1630 = vpop.permute.xlu0 %1629
      %v1632 = vld [vmem:[%s355] sm:$0xf]
      %v1633 = vunpack.c.l.bf16 %v1632
      %v1635 = vcombine.high %v1633, %v1633
      %v1637 = vunpack.c.l.s4 1966171168
      %v1638 = vunpack.c.0.s8 %v1637
      %v1639 = vlaneseq
      %v1640 = vshrl.u32 %v1639, 7
      %v1641 = vsub.s32 %v1638, %v1640
      %v1642 = vrot.slane %v1633, %v1641
      %v1644 = vunpack.c.l.s4 1966171168
      %v1645 = vunpack.c.0.s8 %v1644
      %v1646 = vlaneseq
      %v1647 = vshrl.u32 %v1646, 7
      %v1648 = vsub.s32 %v1645, %v1647
      %v1649 = vrot.slane %v1635, %v1648
      %v1650 = vcombine.high %v1642, %v1642
      %v1651 = vcombine.high %v1649, %v1649
      %v1653 = vunpack.c.l.s4 1966171168
      %v1654 = vunpack.c.0.s8 %v1653
      %v1655 = vlaneseq
      %v1656 = vshrl.u32 %v1655, 7
      %v1657 = vsub.s32 %v1654, %v1656
      %v1658 = vrot.slane %v1642, %v1657
      %v1660 = vunpack.c.l.s4 1966171168
      %v1661 = vunpack.c.0.s8 %v1660
      %v1662 = vlaneseq
      %v1663 = vshrl.u32 %v1662, 7
      %v1664 = vsub.s32 %v1661, %v1663
      %v1665 = vrot.slane %v1649, %v1664
      %v1667 = vunpack.c.l.s4 1966171168
      %v1668 = vunpack.c.0.s8 %v1667
      %v1669 = vlaneseq
      %v1670 = vshrl.u32 %v1669, 7
      %v1671 = vsub.s32 %v1668, %v1670
      %v1672 = vrot.slane %v1650, %v1671
      %v1674 = vunpack.c.l.s4 1966171168
      %v1675 = vunpack.c.0.s8 %v1674
      %v1676 = vlaneseq
      %v1677 = vshrl.u32 %v1676, 7
      %v1678 = vsub.s32 %v1675, %v1677
      %v1679 = vrot.slane %v1651, %v1678
      %v1680 = vcombine.high %v1658, %v1658
      %v1681 = vcombine.high %v1665, %v1665
      %v1682 = vcombine.high %v1672, %v1672
      %v1683 = vld [vmem:[#allocation2] sm:$0xff]
      %v1684 = vld [vmem:[#allocation2 + $0x8] sm:$0xff]
      %v1685 = vlaneseq
      %v1686 = vshrl.u32 %v1685, 7
      %v1687 = vsub.s32 0, %v1686
      %v1688 = vrot.slane %v1658, %v1687
      %v1689 = vlaneseq
      %v1690 = vshrl.u32 %v1689, 7
      %v1691 = vsub.s32 0, %v1690
      %v1692 = vrot.slane %v1672, %v1691
      %v1693 = vlaneseq
      %v1694 = vshrl.u32 %v1693, 7
      %v1695 = vsub.s32 0, %v1694
      %v1696 = vrot.slane %v1680, %v1695
      %v1697 = vlaneseq
      %v1698 = vshrl.u32 %v1697, 7
      %v1699 = vsub.s32 0, %v1698
      %v1700 = vrot.slane %v1682, %v1699
      %v1701 = vlaneseq
      %v1702 = vshrl.u32 %v1701, 7
      %v1703 = vsub.s32 0, %v1702
      %v1704 = vrot.slane %v1665, %v1703
      %v1705 = vlaneseq
      %v1706 = vshrl.u32 %v1705, 7
      %v1707 = vsub.s32 0, %v1706
      %v1708 = vrot.slane %v1679, %v1707
      %v1709 = vlaneseq
      %v1710 = vshrl.u32 %v1709, 7
      %v1711 = vsub.s32 0, %v1710
      %v1712 = vrot.slane %v1681, %v1711
      %v1720 = vmul.f32 %v1688, %v1683
      %v1721 = vmul.f32 %v1688, %v1684
      %v1722 = vmul.f32 %v1692, %v1683
      %v1723 = vmul.f32 %v1692, %v1684
      %v1724 = vmul.f32 %v1696, %v1683
      %v1725 = vmul.f32 %v1696, %v1684
      %v1726 = vmul.f32 %v1700, %v1683
      %v1727 = vmul.f32 %v1700, %v1684
      %v1728 = vmul.f32 %v1704, %v1683
      %v1729 = vmul.f32 %v1704, %v1684
      %v1730 = vmul.f32 %v1708, %v1683
      %v1731 = vmul.f32 %v1708, %v1684
      %v1732 = vmul.f32 %v1712, %v1683
      %v1733 = vmul.f32 %v1712, %v1684
      %v1734 = vadd.f32 %v1720, 0.0
      %v1735 = vadd.f32 %v1721, 0.0
      %v1736 = vadd.f32 %v1722, 0.0
      %v1737 = vadd.f32 %v1723, 0.0
      %v1738 = vadd.f32 %v1724, 0.0
      %v1739 = vadd.f32 %v1725, 0.0
      %v1740 = vadd.f32 %v1726, 0.0
      %v1741 = vadd.f32 %v1727, 0.0
      %v1742 = vadd.f32 %v1728, 0.0
      %v1743 = vadd.f32 %v1729, 0.0
      %v1744 = vadd.f32 %v1730, 0.0
      %v1745 = vadd.f32 %v1731, 0.0
      %v1746 = vadd.f32 %v1732, 0.0
      %v1747 = vadd.f32 %v1733, 0.0
      %s1748 = scalar_lea.vmem %s355, 4
      %v1749 = vld [vmem:[%s1748] sm:$0xf]
      %v1750 = vunpack.c.l.bf16 %v1749
      %v1752 = vcombine.high %v1750, %v1750
      %v1754 = vunpack.c.l.s4 1966171168
      %v1755 = vunpack.c.0.s8 %v1754
      %v1756 = vlaneseq
      %v1757 = vshrl.u32 %v1756, 7
      %v1758 = vsub.s32 %v1755, %v1757
      %v1759 = vrot.slane %v1750, %v1758
      %v1761 = vunpack.c.l.s4 1966171168
      %v1762 = vunpack.c.0.s8 %v1761
      %v1763 = vlaneseq
      %v1764 = vshrl.u32 %v1763, 7
      %v1765 = vsub.s32 %v1762, %v1764
      %v1766 = vrot.slane %v1752, %v1765
      %v1767 = vcombine.high %v1759, %v1759
      %v1768 = vcombine.high %v1766, %v1766
      %v1770 = vunpack.c.l.s4 1966171168
      %v1771 = vunpack.c.0.s8 %v1770
      %v1772 = vlaneseq
      %v1773 = vshrl.u32 %v1772, 7
      %v1774 = vsub.s32 %v1771, %v1773
      %v1775 = vrot.slane %v1759, %v1774
      %v1777 = vunpack.c.l.s4 1966171168
      %v1778 = vunpack.c.0.s8 %v1777
      %v1779 = vlaneseq
      %v1780 = vshrl.u32 %v1779, 7
      %v1781 = vsub.s32 %v1778, %v1780
      %v1782 = vrot.slane %v1766, %v1781
      %v1784 = vunpack.c.l.s4 1966171168
      %v1785 = vunpack.c.0.s8 %v1784
      %v1786 = vlaneseq
      %v1787 = vshrl.u32 %v1786, 7
      %v1788 = vsub.s32 %v1785, %v1787
      %v1789 = vrot.slane %v1767, %v1788
      %v1791 = vunpack.c.l.s4 1966171168
      %v1792 = vunpack.c.0.s8 %v1791
      %v1793 = vlaneseq
      %v1794 = vshrl.u32 %v1793, 7
      %v1795 = vsub.s32 %v1792, %v1794
      %v1796 = vrot.slane %v1768, %v1795
      %v1797 = vcombine.high %v1775, %v1775
      %v1798 = vcombine.high %v1782, %v1782
      %v1799 = vcombine.high %v1789, %v1789
      %s1800 = scalar_lea.vmem [#allocation2], 16
      %v1801 = vld [vmem:[%s1800] sm:$0xff]
      %v1802 = vld [vmem:[%s1800 + $0x8] sm:$0xff]
      %v1803 = vlaneseq
      %v1804 = vshrl.u32 %v1803, 7
      %v1805 = vsub.s32 0, %v1804
      %v1806 = vrot.slane %v1775, %v1805
      %v1807 = vlaneseq
      %v1808 = vshrl.u32 %v1807, 7
      %v1809 = vsub.s32 0, %v1808
      %v1810 = vrot.slane %v1789, %v1809
      %v1811 = vlaneseq
      %v1812 = vshrl.u32 %v1811, 7
      %v1813 = vsub.s32 0, %v1812
      %v1814 = vrot.slane %v1797, %v1813
      %v1815 = vlaneseq
      %v1816 = vshrl.u32 %v1815, 7
      %v1817 = vsub.s32 0, %v1816
      %v1818 = vrot.slane %v1799, %v1817
      %v1819 = vlaneseq
      %v1820 = vshrl.u32 %v1819, 7
      %v1821 = vsub.s32 0, %v1820
      %v1822 = vrot.slane %v1782, %v1821
      %v1823 = vlaneseq
      %v1824 = vshrl.u32 %v1823, 7
      %v1825 = vsub.s32 0, %v1824
      %v1826 = vrot.slane %v1796, %v1825
      %v1827 = vlaneseq
      %v1828 = vshrl.u32 %v1827, 7
      %v1829 = vsub.s32 0, %v1828
      %v1830 = vrot.slane %v1798, %v1829
      %v1838 = vmul.f32 %v1806, %v1801
      %v1839 = vmul.f32 %v1806, %v1802
      %v1840 = vmul.f32 %v1810, %v1801
      %v1841 = vmul.f32 %v1810, %v1802
      %v1842 = vmul.f32 %v1814, %v1801
      %v1843 = vmul.f32 %v1814, %v1802
      %v1844 = vmul.f32 %v1818, %v1801
      %v1845 = vmul.f32 %v1818, %v1802
      %v1846 = vmul.f32 %v1822, %v1801
      %v1847 = vmul.f32 %v1822, %v1802
      %v1848 = vmul.f32 %v1826, %v1801
      %v1849 = vmul.f32 %v1826, %v1802
      %v1850 = vmul.f32 %v1830, %v1801
      %v1851 = vmul.f32 %v1830, %v1802
      %v1852 = vadd.f32 %v1734, %v1838
      %v1853 = vadd.f32 %v1735, %v1839
      %v1854 = vadd.f32 %v1736, %v1840
      %v1855 = vadd.f32 %v1737, %v1841
      %v1856 = vadd.f32 %v1738, %v1842
      %v1857 = vadd.f32 %v1739, %v1843
      %v1858 = vadd.f32 %v1740, %v1844
      %v1859 = vadd.f32 %v1741, %v1845
      %v1860 = vadd.f32 %v1742, %v1846
      %v1861 = vadd.f32 %v1743, %v1847
      %v1862 = vadd.f32 %v1744, %v1848
      %v1863 = vadd.f32 %v1745, %v1849
      %v1864 = vadd.f32 %v1746, %v1850
      %v1865 = vadd.f32 %v1747, %v1851
      %s1866 = scalar_lea.vmem %s355, 8
      %v1867 = vld [vmem:[%s1866] sm:$0xf]
      %v1868 = vunpack.c.l.bf16 %v1867
      %v1870 = vcombine.high %v1868, %v1868
      %v1872 = vunpack.c.l.s4 1966171168
      %v1873 = vunpack.c.0.s8 %v1872
      %v1874 = vlaneseq
      %v1875 = vshrl.u32 %v1874, 7
      %v1876 = vsub.s32 %v1873, %v1875
      %v1877 = vrot.slane %v1868, %v1876
      %v1879 = vunpack.c.l.s4 1966171168
      %v1880 = vunpack.c.0.s8 %v1879
      %v1881 = vlaneseq
      %v1882 = vshrl.u32 %v1881, 7
      %v1883 = vsub.s32 %v1880, %v1882
      %v1884 = vrot.slane %v1870, %v1883
      %v1885 = vcombine.high %v1877, %v1877
      %v1886 = vcombine.high %v1884, %v1884
      %v1888 = vunpack.c.l.s4 1966171168
      %v1889 = vunpack.c.0.s8 %v1888
      %v1890 = vlaneseq
      %v1891 = vshrl.u32 %v1890, 7
      %v1892 = vsub.s32 %v1889, %v1891
      %v1893 = vrot.slane %v1877, %v1892
      %v1895 = vunpack.c.l.s4 1966171168
      %v1896 = vunpack.c.0.s8 %v1895
      %v1897 = vlaneseq
      %v1898 = vshrl.u32 %v1897, 7
      %v1899 = vsub.s32 %v1896, %v1898
      %v1900 = vrot.slane %v1884, %v1899
      %v1902 = vunpack.c.l.s4 1966171168
      %v1903 = vunpack.c.0.s8 %v1902
      %v1904 = vlaneseq
      %v1905 = vshrl.u32 %v1904, 7
      %v1906 = vsub.s32 %v1903, %v1905
      %v1907 = vrot.slane %v1885, %v1906
      %v1909 = vunpack.c.l.s4 1966171168
      %v1910 = vunpack.c.0.s8 %v1909
      %v1911 = vlaneseq
      %v1912 = vshrl.u32 %v1911, 7
      %v1913 = vsub.s32 %v1910, %v1912
      %v1914 = vrot.slane %v1886, %v1913
      %v1915 = vcombine.high %v1893, %v1893
      %v1916 = vcombine.high %v1900, %v1900
      %v1917 = vcombine.high %v1907, %v1907
      %s1918 = scalar_lea.vmem [#allocation2], 32
      %v1919 = vld [vmem:[%s1918] sm:$0xff]
      %v1920 = vld [vmem:[%s1918 + $0x8] sm:$0xff]
      %v1921 = vlaneseq
      %v1922 = vshrl.u32 %v1921, 7
      %v1923 = vsub.s32 0, %v1922
      %v1924 = vrot.slane %v1893, %v1923
      %v1925 = vlaneseq
      %v1926 = vshrl.u32 %v1925, 7
      %v1927 = vsub.s32 0, %v1926
      %v1928 = vrot.slane %v1907, %v1927
      %v1929 = vlaneseq
      %v1930 = vshrl.u32 %v1929, 7
      %v1931 = vsub.s32 0, %v1930
      %v1932 = vrot.slane %v1915, %v1931
      %v1933 = vlaneseq
      %v1934 = vshrl.u32 %v1933, 7
      %v1935 = vsub.s32 0, %v1934
      %v1936 = vrot.slane %v1917, %v1935
      %v1937 = vlaneseq
      %v1938 = vshrl.u32 %v1937, 7
      %v1939 = vsub.s32 0, %v1938
      %v1940 = vrot.slane %v1900, %v1939
      %v1941 = vlaneseq
      %v1942 = vshrl.u32 %v1941, 7
      %v1943 = vsub.s32 0, %v1942
      %v1944 = vrot.slane %v1914, %v1943
      %v1945 = vlaneseq
      %v1946 = vshrl.u32 %v1945, 7
      %v1947 = vsub.s32 0, %v1946
      %v1948 = vrot.slane %v1916, %v1947
      %v1956 = vmul.f32 %v1924, %v1919
      %v1957 = vmul.f32 %v1924, %v1920
      %v1958 = vmul.f32 %v1928, %v1919
      %v1959 = vmul.f32 %v1928, %v1920
      %v1960 = vmul.f32 %v1932, %v1919
      %v1961 = vmul.f32 %v1932, %v1920
      %v1962 = vmul.f32 %v1936, %v1919
      %v1963 = vmul.f32 %v1936, %v1920
      %v1964 = vmul.f32 %v1940, %v1919
      %v1965 = vmul.f32 %v1940, %v1920
      %v1966 = vmul.f32 %v1944, %v1919
      %v1967 = vmul.f32 %v1944, %v1920
      %v1968 = vmul.f32 %v1948, %v1919
      %v1969 = vmul.f32 %v1948, %v1920
      %v1970 = vadd.f32 %v1852, %v1956
      %v1971 = vadd.f32 %v1853, %v1957
      %v1972 = vadd.f32 %v1854, %v1958
      %v1973 = vadd.f32 %v1855, %v1959
      %v1974 = vadd.f32 %v1856, %v1960
      %v1975 = vadd.f32 %v1857, %v1961
      %v1976 = vadd.f32 %v1858, %v1962
      %v1977 = vadd.f32 %v1859, %v1963
      %v1978 = vadd.f32 %v1860, %v1964
      %v1979 = vadd.f32 %v1861, %v1965
      %v1980 = vadd.f32 %v1862, %v1966
      %v1981 = vadd.f32 %v1863, %v1967
      %v1982 = vadd.f32 %v1864, %v1968
      %v1983 = vadd.f32 %v1865, %v1969
      %s1984 = scalar_lea.vmem %s355, 12
      %v1985 = vld [vmem:[%s1984] sm:$0xf]
      %v1986 = vunpack.c.l.bf16 %v1985
      %v1988 = vcombine.high %v1986, %v1986
      %v1990 = vunpack.c.l.s4 1966171168
      %v1991 = vunpack.c.0.s8 %v1990
      %v1992 = vlaneseq
      %v1993 = vshrl.u32 %v1992, 7
      %v1994 = vsub.s32 %v1991, %v1993
      %v1995 = vrot.slane %v1986, %v1994
      %v1997 = vunpack.c.l.s4 1966171168
      %v1998 = vunpack.c.0.s8 %v1997
      %v1999 = vlaneseq
      %v2000 = vshrl.u32 %v1999, 7
      %v2001 = vsub.s32 %v1998, %v2000
      %v2002 = vrot.slane %v1988, %v2001
      %v2003 = vcombine.high %v1995, %v1995
      %v2004 = vcombine.high %v2002, %v2002
      %v2006 = vunpack.c.l.s4 1966171168
      %v2007 = vunpack.c.0.s8 %v2006
      %v2008 = vlaneseq
      %v2009 = vshrl.u32 %v2008, 7
      %v2010 = vsub.s32 %v2007, %v2009
      %v2011 = vrot.slane %v1995, %v2010
      %v2013 = vunpack.c.l.s4 1966171168
      %v2014 = vunpack.c.0.s8 %v2013
      %v2015 = vlaneseq
      %v2016 = vshrl.u32 %v2015, 7
      %v2017 = vsub.s32 %v2014, %v2016
      %v2018 = vrot.slane %v2002, %v2017
      %v2020 = vunpack.c.l.s4 1966171168
      %v2021 = vunpack.c.0.s8 %v2020
      %v2022 = vlaneseq
      %v2023 = vshrl.u32 %v2022, 7
      %v2024 = vsub.s32 %v2021, %v2023
      %v2025 = vrot.slane %v2003, %v2024
      %v2027 = vunpack.c.l.s4 1966171168
      %v2028 = vunpack.c.0.s8 %v2027
      %v2029 = vlaneseq
      %v2030 = vshrl.u32 %v2029, 7
      %v2031 = vsub.s32 %v2028, %v2030
      %v2032 = vrot.slane %v2004, %v2031
      %v2033 = vcombine.high %v2011, %v2011
      %v2034 = vcombine.high %v2018, %v2018
      %v2035 = vcombine.high %v2025, %v2025
      %s2036 = scalar_lea.vmem [#allocation2], 48
      %v2037 = vld [vmem:[%s2036] sm:$0xff]
      %v2038 = vld [vmem:[%s2036 + $0x8] sm:$0xff]
      %v2039 = vlaneseq
      %v2040 = vshrl.u32 %v2039, 7
      %v2041 = vsub.s32 0, %v2040
      %v2042 = vrot.slane %v2011, %v2041
      %v2043 = vlaneseq
      %v2044 = vshrl.u32 %v2043, 7
      %v2045 = vsub.s32 0, %v2044
      %v2046 = vrot.slane %v2025, %v2045
      %v2047 = vlaneseq
      %v2048 = vshrl.u32 %v2047, 7
      %v2049 = vsub.s32 0, %v2048
      %v2050 = vrot.slane %v2033, %v2049
      %v2051 = vlaneseq
      %v2052 = vshrl.u32 %v2051, 7
      %v2053 = vsub.s32 0, %v2052
      %v2054 = vrot.slane %v2035, %v2053
      %v2055 = vlaneseq
      %v2056 = vshrl.u32 %v2055, 7
      %v2057 = vsub.s32 0, %v2056
      %v2058 = vrot.slane %v2018, %v2057
      %v2059 = vlaneseq
      %v2060 = vshrl.u32 %v2059, 7
      %v2061 = vsub.s32 0, %v2060
      %v2062 = vrot.slane %v2032, %v2061
      %v2063 = vlaneseq
      %v2064 = vshrl.u32 %v2063, 7
      %v2065 = vsub.s32 0, %v2064
      %v2066 = vrot.slane %v2034, %v2065
      %v2074 = vmul.f32 %v2042, %v2037
      %v2075 = vmul.f32 %v2042, %v2038
      %v2076 = vmul.f32 %v2046, %v2037
      %v2077 = vmul.f32 %v2046, %v2038
      %v2078 = vmul.f32 %v2050, %v2037
      %v2079 = vmul.f32 %v2050, %v2038
      %v2080 = vmul.f32 %v2054, %v2037
      %v2081 = vmul.f32 %v2054, %v2038
      %v2082 = vmul.f32 %v2058, %v2037
      %v2083 = vmul.f32 %v2058, %v2038
      %v2084 = vmul.f32 %v2062, %v2037
      %v2085 = vmul.f32 %v2062, %v2038
      %v2086 = vmul.f32 %v2066, %v2037
      %v2087 = vmul.f32 %v2066, %v2038
      %v2088 = vadd.f32 %v1970, %v2074
      %v2089 = vadd.f32 %v1971, %v2075
      %v2090 = vadd.f32 %v1972, %v2076
      %v2091 = vadd.f32 %v1973, %v2077
      %v2092 = vadd.f32 %v1974, %v2078
      %v2093 = vadd.f32 %v1975, %v2079
      %v2094 = vadd.f32 %v1976, %v2080
      %v2095 = vadd.f32 %v1977, %v2081
      %v2096 = vadd.f32 %v1978, %v2082
      %v2097 = vadd.f32 %v1979, %v2083
      %v2098 = vadd.f32 %v1980, %v2084
      %v2099 = vadd.f32 %v1981, %v2085
      %v2100 = vadd.f32 %v1982, %v2086
      %v2101 = vadd.f32 %v1983, %v2087
      %s2102 = scalar_lea.vmem %s355, 16
      %v2103 = vld [vmem:[%s2102] sm:$0xf]
      %v2104 = vunpack.c.l.bf16 %v2103
      %v2106 = vcombine.high %v2104, %v2104
      %v2108 = vunpack.c.l.s4 1966171168
      %v2109 = vunpack.c.0.s8 %v2108
      %v2110 = vlaneseq
      %v2111 = vshrl.u32 %v2110, 7
      %v2112 = vsub.s32 %v2109, %v2111
      %v2113 = vrot.slane %v2104, %v2112
      %v2115 = vunpack.c.l.s4 1966171168
      %v2116 = vunpack.c.0.s8 %v2115
      %v2117 = vlaneseq
      %v2118 = vshrl.u32 %v2117, 7
      %v2119 = vsub.s32 %v2116, %v2118
      %v2120 = vrot.slane %v2106, %v2119
      %v2121 = vcombine.high %v2113, %v2113
      %v2122 = vcombine.high %v2120, %v2120
      %v2124 = vunpack.c.l.s4 1966171168
      %v2125 = vunpack.c.0.s8 %v2124
      %v2126 = vlaneseq
      %v2127 = vshrl.u32 %v2126, 7
      %v2128 = vsub.s32 %v2125, %v2127
      %v2129 = vrot.slane %v2113, %v2128
      %v2131 = vunpack.c.l.s4 1966171168
      %v2132 = vunpack.c.0.s8 %v2131
      %v2133 = vlaneseq
      %v2134 = vshrl.u32 %v2133, 7
      %v2135 = vsub.s32 %v2132, %v2134
      %v2136 = vrot.slane %v2120, %v2135
      %v2138 = vunpack.c.l.s4 1966171168
      %v2139 = vunpack.c.0.s8 %v2138
      %v2140 = vlaneseq
      %v2141 = vshrl.u32 %v2140, 7
      %v2142 = vsub.s32 %v2139, %v2141
      %v2143 = vrot.slane %v2121, %v2142
      %v2145 = vunpack.c.l.s4 1966171168
      %v2146 = vunpack.c.0.s8 %v2145
      %v2147 = vlaneseq
      %v2148 = vshrl.u32 %v2147, 7
      %v2149 = vsub.s32 %v2146, %v2148
      %v2150 = vrot.slane %v2122, %v2149
      %v2151 = vcombine.high %v2129, %v2129
      %v2152 = vcombine.high %v2136, %v2136
      %v2153 = vcombine.high %v2143, %v2143
      %s2154 = scalar_lea.vmem [#allocation2], 64
      %v2155 = vld [vmem:[%s2154] sm:$0xff]
      %v2156 = vld [vmem:[%s2154 + $0x8] sm:$0xff]
      %v2157 = vlaneseq
      %v2158 = vshrl.u32 %v2157, 7
      %v2159 = vsub.s32 0, %v2158
      %v2160 = vrot.slane %v2129, %v2159
      %v2161 = vlaneseq
      %v2162 = vshrl.u32 %v2161, 7
      %v2163 = vsub.s32 0, %v2162
      %v2164 = vrot.slane %v2143, %v2163
      %v2165 = vlaneseq
      %v2166 = vshrl.u32 %v2165, 7
      %v2167 = vsub.s32 0, %v2166
      %v2168 = vrot.slane %v2151, %v2167
      %v2169 = vlaneseq
      %v2170 = vshrl.u32 %v2169, 7
      %v2171 = vsub.s32 0, %v2170
      %v2172 = vrot.slane %v2153, %v2171
      %v2173 = vlaneseq
      %v2174 = vshrl.u32 %v2173, 7
      %v2175 = vsub.s32 0, %v2174
      %v2176 = vrot.slane %v2136, %v2175
      %v2177 = vlaneseq
      %v2178 = vshrl.u32 %v2177, 7
      %v2179 = vsub.s32 0, %v2178
      %v2180 = vrot.slane %v2150, %v2179
      %v2181 = vlaneseq
      %v2182 = vshrl.u32 %v2181, 7
      %v2183 = vsub.s32 0, %v2182
      %v2184 = vrot.slane %v2152, %v2183
      %v2192 = vmul.f32 %v2160, %v2155
      %v2193 = vmul.f32 %v2160, %v2156
      %v2194 = vmul.f32 %v2164, %v2155
      %v2195 = vmul.f32 %v2164, %v2156
      %v2196 = vmul.f32 %v2168, %v2155
      %v2197 = vmul.f32 %v2168, %v2156
      %v2198 = vmul.f32 %v2172, %v2155
      %v2199 = vmul.f32 %v2172, %v2156
      %v2200 = vmul.f32 %v2176, %v2155
      %v2201 = vmul.f32 %v2176, %v2156
      %v2202 = vmul.f32 %v2180, %v2155
      %v2203 = vmul.f32 %v2180, %v2156
      %v2204 = vmul.f32 %v2184, %v2155
      %v2205 = vmul.f32 %v2184, %v2156
      %v2206 = vadd.f32 %v2088, %v2192
      %v2207 = vadd.f32 %v2089, %v2193
      %v2208 = vadd.f32 %v2090, %v2194
      %v2209 = vadd.f32 %v2091, %v2195
      %v2210 = vadd.f32 %v2092, %v2196
      %v2211 = vadd.f32 %v2093, %v2197
      %v2212 = vadd.f32 %v2094, %v2198
      %v2213 = vadd.f32 %v2095, %v2199
      %v2214 = vadd.f32 %v2096, %v2200
      %v2215 = vadd.f32 %v2097, %v2201
      %v2216 = vadd.f32 %v2098, %v2202
      %v2217 = vadd.f32 %v2099, %v2203
      %v2218 = vadd.f32 %v2100, %v2204
      %v2219 = vadd.f32 %v2101, %v2205
      %s2220 = scalar_lea.vmem %s355, 20
      %v2221 = vld [vmem:[%s2220] sm:$0xf]
      %v2222 = vunpack.c.l.bf16 %v2221
      %v2224 = vcombine.high %v2222, %v2222
      %v2226 = vunpack.c.l.s4 1966171168
      %v2227 = vunpack.c.0.s8 %v2226
      %v2228 = vlaneseq
      %v2229 = vshrl.u32 %v2228, 7
      %v2230 = vsub.s32 %v2227, %v2229
      %v2231 = vrot.slane %v2222, %v2230
      %v2233 = vunpack.c.l.s4 1966171168
      %v2234 = vunpack.c.0.s8 %v2233
      %v2235 = vlaneseq
      %v2236 = vshrl.u32 %v2235, 7
      %v2237 = vsub.s32 %v2234, %v2236
      %v2238 = vrot.slane %v2224, %v2237
      %v2239 = vcombine.high %v2231, %v2231
      %v2240 = vcombine.high %v2238, %v2238
      %v2242 = vunpack.c.l.s4 1966171168
      %v2243 = vunpack.c.0.s8 %v2242
      %v2244 = vlaneseq
      %v2245 = vshrl.u32 %v2244, 7
      %v2246 = vsub.s32 %v2243, %v2245
      %v2247 = vrot.slane %v2231, %v2246
      %v2249 = vunpack.c.l.s4 1966171168
      %v2250 = vunpack.c.0.s8 %v2249
      %v2251 = vlaneseq
      %v2252 = vshrl.u32 %v2251, 7
      %v2253 = vsub.s32 %v2250, %v2252
      %v2254 = vrot.slane %v2238, %v2253
      %v2256 = vunpack.c.l.s4 1966171168
      %v2257 = vunpack.c.0.s8 %v2256
      %v2258 = vlaneseq
      %v2259 = vshrl.u32 %v2258, 7
      %v2260 = vsub.s32 %v2257, %v2259
      %v2261 = vrot.slane %v2239, %v2260
      %v2263 = vunpack.c.l.s4 1966171168
      %v2264 = vunpack.c.0.s8 %v2263
      %v2265 = vlaneseq
      %v2266 = vshrl.u32 %v2265, 7
      %v2267 = vsub.s32 %v2264, %v2266
      %v2268 = vrot.slane %v2240, %v2267
      %v2269 = vcombine.high %v2247, %v2247
      %v2270 = vcombine.high %v2254, %v2254
      %v2271 = vcombine.high %v2261, %v2261
      %s2272 = scalar_lea.vmem [#allocation2], 80
      %v2273 = vld [vmem:[%s2272] sm:$0xff]
      %v2274 = vld [vmem:[%s2272 + $0x8] sm:$0xff]
      %v2275 = vlaneseq
      %v2276 = vshrl.u32 %v2275, 7
      %v2277 = vsub.s32 0, %v2276
      %v2278 = vrot.slane %v2247, %v2277
      %v2279 = vlaneseq
      %v2280 = vshrl.u32 %v2279, 7
      %v2281 = vsub.s32 0, %v2280
      %v2282 = vrot.slane %v2261, %v2281
      %v2283 = vlaneseq
      %v2284 = vshrl.u32 %v2283, 7
      %v2285 = vsub.s32 0, %v2284
      %v2286 = vrot.slane %v2269, %v2285
      %v2287 = vlaneseq
      %v2288 = vshrl.u32 %v2287, 7
      %v2289 = vsub.s32 0, %v2288
      %v2290 = vrot.slane %v2271, %v2289
      %v2291 = vlaneseq
      %v2292 = vshrl.u32 %v2291, 7
      %v2293 = vsub.s32 0, %v2292
      %v2294 = vrot.slane %v2254, %v2293
      %v2295 = vlaneseq
      %v2296 = vshrl.u32 %v2295, 7
      %v2297 = vsub.s32 0, %v2296
      %v2298 = vrot.slane %v2268, %v2297
      %v2299 = vlaneseq
      %v2300 = vshrl.u32 %v2299, 7
      %v2301 = vsub.s32 0, %v2300
      %v2302 = vrot.slane %v2270, %v2301
      %v2310 = vmul.f32 %v2278, %v2273
      %v2311 = vmul.f32 %v2278, %v2274
      %v2312 = vmul.f32 %v2282, %v2273
      %v2313 = vmul.f32 %v2282, %v2274
      %v2314 = vmul.f32 %v2286, %v2273
      %v2315 = vmul.f32 %v2286, %v2274
      %v2316 = vmul.f32 %v2290, %v2273
      %v2317 = vmul.f32 %v2290, %v2274
      %v2318 = vmul.f32 %v2294, %v2273
      %v2319 = vmul.f32 %v2294, %v2274
      %v2320 = vmul.f32 %v2298, %v2273
      %v2321 = vmul.f32 %v2298, %v2274
      %v2322 = vmul.f32 %v2302, %v2273
      %v2323 = vmul.f32 %v2302, %v2274
      %v2324 = vadd.f32 %v2206, %v2310
      %v2325 = vadd.f32 %v2207, %v2311
      %v2326 = vadd.f32 %v2208, %v2312
      %v2327 = vadd.f32 %v2209, %v2313
      %v2328 = vadd.f32 %v2210, %v2314
      %v2329 = vadd.f32 %v2211, %v2315
      %v2330 = vadd.f32 %v2212, %v2316
      %v2331 = vadd.f32 %v2213, %v2317
      %v2332 = vadd.f32 %v2214, %v2318
      %v2333 = vadd.f32 %v2215, %v2319
      %v2334 = vadd.f32 %v2216, %v2320
      %v2335 = vadd.f32 %v2217, %v2321
      %v2336 = vadd.f32 %v2218, %v2322
      %v2337 = vadd.f32 %v2219, %v2323
      %s2338 = scalar_lea.vmem %s355, 24
      %v2339 = vld [vmem:[%s2338] sm:$0xf]
      %v2340 = vunpack.c.l.bf16 %v2339
      %v2342 = vcombine.high %v2340, %v2340
      %v2344 = vunpack.c.l.s4 1966171168
      %v2345 = vunpack.c.0.s8 %v2344
      %v2346 = vlaneseq
      %v2347 = vshrl.u32 %v2346, 7
      %v2348 = vsub.s32 %v2345, %v2347
      %v2349 = vrot.slane %v2340, %v2348
      %v2351 = vunpack.c.l.s4 1966171168
      %v2352 = vunpack.c.0.s8 %v2351
      %v2353 = vlaneseq
      %v2354 = vshrl.u32 %v2353, 7
      %v2355 = vsub.s32 %v2352, %v2354
      %v2356 = vrot.slane %v2342, %v2355
      %v2357 = vcombine.high %v2349, %v2349
      %v2358 = vcombine.high %v2356, %v2356
      %v2360 = vunpack.c.l.s4 1966171168
      %v2361 = vunpack.c.0.s8 %v2360
      %v2362 = vlaneseq
      %v2363 = vshrl.u32 %v2362, 7
      %v2364 = vsub.s32 %v2361, %v2363
      %v2365 = vrot.slane %v2349, %v2364
      %v2367 = vunpack.c.l.s4 1966171168
      %v2368 = vunpack.c.0.s8 %v2367
      %v2369 = vlaneseq
      %v2370 = vshrl.u32 %v2369, 7
      %v2371 = vsub.s32 %v2368, %v2370
      %v2372 = vrot.slane %v2356, %v2371
      %v2374 = vunpack.c.l.s4 1966171168
      %v2375 = vunpack.c.0.s8 %v2374
      %v2376 = vlaneseq
      %v2377 = vshrl.u32 %v2376, 7
      %v2378 = vsub.s32 %v2375, %v2377
      %v2379 = vrot.slane %v2357, %v2378
      %v2381 = vunpack.c.l.s4 1966171168
      %v2382 = vunpack.c.0.s8 %v2381
      %v2383 = vlaneseq
      %v2384 = vshrl.u32 %v2383, 7
      %v2385 = vsub.s32 %v2382, %v2384
      %v2386 = vrot.slane %v2358, %v2385
      %v2387 = vcombine.high %v2365, %v2365
      %v2388 = vcombine.high %v2372, %v2372
      %v2389 = vcombine.high %v2379, %v2379
      %s2390 = scalar_lea.vmem [#allocation2], 96
      %v2391 = vld [vmem:[%s2390] sm:$0xff]
      %v2392 = vld [vmem:[%s2390 + $0x8] sm:$0xff]
      %v2393 = vlaneseq
      %v2394 = vshrl.u32 %v2393, 7
      %v2395 = vsub.s32 0, %v2394
      %v2396 = vrot.slane %v2365, %v2395
      %v2397 = vlaneseq
      %v2398 = vshrl.u32 %v2397, 7
      %v2399 = vsub.s32 0, %v2398
      %v2400 = vrot.slane %v2379, %v2399
      %v2401 = vlaneseq
      %v2402 = vshrl.u32 %v2401, 7
      %v2403 = vsub.s32 0, %v2402
      %v2404 = vrot.slane %v2387, %v2403
      %v2405 = vlaneseq
      %v2406 = vshrl.u32 %v2405, 7
      %v2407 = vsub.s32 0, %v2406
      %v2408 = vrot.slane %v2389, %v2407
      %v2409 = vlaneseq
      %v2410 = vshrl.u32 %v2409, 7
      %v2411 = vsub.s32 0, %v2410
      %v2412 = vrot.slane %v2372, %v2411
      %v2413 = vlaneseq
      %v2414 = vshrl.u32 %v2413, 7
      %v2415 = vsub.s32 0, %v2414
      %v2416 = vrot.slane %v2386, %v2415
      %v2417 = vlaneseq
      %v2418 = vshrl.u32 %v2417, 7
      %v2419 = vsub.s32 0, %v2418
      %v2420 = vrot.slane %v2388, %v2419
      %v2428 = vmul.f32 %v2396, %v2391
      %v2429 = vmul.f32 %v2396, %v2392
      %v2430 = vmul.f32 %v2400, %v2391
      %v2431 = vmul.f32 %v2400, %v2392
      %v2432 = vmul.f32 %v2404, %v2391
      %v2433 = vmul.f32 %v2404, %v2392
      %v2434 = vmul.f32 %v2408, %v2391
      %v2435 = vmul.f32 %v2408, %v2392
      %v2436 = vmul.f32 %v2412, %v2391
      %v2437 = vmul.f32 %v2412, %v2392
      %v2438 = vmul.f32 %v2416, %v2391
      %v2439 = vmul.f32 %v2416, %v2392
      %v2440 = vmul.f32 %v2420, %v2391
      %v2441 = vmul.f32 %v2420, %v2392
      %v2442 = vadd.f32 %v2324, %v2428
      %v2443 = vadd.f32 %v2325, %v2429
      %v2444 = vadd.f32 %v2326, %v2430
      %v2445 = vadd.f32 %v2327, %v2431
      %v2446 = vadd.f32 %v2328, %v2432
      %v2447 = vadd.f32 %v2329, %v2433
      %v2448 = vadd.f32 %v2330, %v2434
      %v2449 = vadd.f32 %v2331, %v2435
      %v2450 = vadd.f32 %v2332, %v2436
      %v2451 = vadd.f32 %v2333, %v2437
      %v2452 = vadd.f32 %v2334, %v2438
      %v2453 = vadd.f32 %v2335, %v2439
      %v2454 = vadd.f32 %v2336, %v2440
      %v2455 = vadd.f32 %v2337, %v2441
      %s2456 = scalar_lea.vmem %s355, 28
      %v2457 = vld [vmem:[%s2456] sm:$0xf]
      %v2458 = vunpack.c.l.bf16 %v2457
      %v2460 = vcombine.high %v2458, %v2458
      %v2462 = vunpack.c.l.s4 1966171168
      %v2463 = vunpack.c.0.s8 %v2462
      %v2464 = vlaneseq
      %v2465 = vshrl.u32 %v2464, 7
      %v2466 = vsub.s32 %v2463, %v2465
      %v2467 = vrot.slane %v2458, %v2466
      %v2469 = vunpack.c.l.s4 1966171168
      %v2470 = vunpack.c.0.s8 %v2469
      %v2471 = vlaneseq
      %v2472 = vshrl.u32 %v2471, 7
      %v2473 = vsub.s32 %v2470, %v2472
      %v2474 = vrot.slane %v2460, %v2473
      %v2475 = vcombine.high %v2467, %v2467
      %v2476 = vcombine.high %v2474, %v2474
      %v2478 = vunpack.c.l.s4 1966171168
      %v2479 = vunpack.c.0.s8 %v2478
      %v2480 = vlaneseq
      %v2481 = vshrl.u32 %v2480, 7
      %v2482 = vsub.s32 %v2479, %v2481
      %v2483 = vrot.slane %v2467, %v2482
      %v2485 = vunpack.c.l.s4 1966171168
      %v2486 = vunpack.c.0.s8 %v2485
      %v2487 = vlaneseq
      %v2488 = vshrl.u32 %v2487, 7
      %v2489 = vsub.s32 %v2486, %v2488
      %v2490 = vrot.slane %v2474, %v2489
      %v2492 = vunpack.c.l.s4 1966171168
      %v2493 = vunpack.c.0.s8 %v2492
      %v2494 = vlaneseq
      %v2495 = vshrl.u32 %v2494, 7
      %v2496 = vsub.s32 %v2493, %v2495
      %v2497 = vrot.slane %v2475, %v2496
      %v2499 = vunpack.c.l.s4 1966171168
      %v2500 = vunpack.c.0.s8 %v2499
      %v2501 = vlaneseq
      %v2502 = vshrl.u32 %v2501, 7
      %v2503 = vsub.s32 %v2500, %v2502
      %v2504 = vrot.slane %v2476, %v2503
      %v2505 = vcombine.high %v2483, %v2483
      %v2506 = vcombine.high %v2490, %v2490
      %v2507 = vcombine.high %v2497, %v2497
      %s2508 = scalar_lea.vmem [#allocation2], 112
      %v2509 = vld [vmem:[%s2508] sm:$0xff]
      %v2510 = vld [vmem:[%s2508 + $0x8] sm:$0xff]
      %v2511 = vlaneseq
      %v2512 = vshrl.u32 %v2511, 7
      %v2513 = vsub.s32 0, %v2512
      %v2514 = vrot.slane %v2483, %v2513
      %v2515 = vlaneseq
      %v2516 = vshrl.u32 %v2515, 7
      %v2517 = vsub.s32 0, %v2516
      %v2518 = vrot.slane %v2497, %v2517
      %v2519 = vlaneseq
      %v2520 = vshrl.u32 %v2519, 7
      %v2521 = vsub.s32 0, %v2520
      %v2522 = vrot.slane %v2505, %v2521
      %v2523 = vlaneseq
      %v2524 = vshrl.u32 %v2523, 7
      %v2525 = vsub.s32 0, %v2524
      %v2526 = vrot.slane %v2507, %v2525
      %v2527 = vlaneseq
      %v2528 = vshrl.u32 %v2527, 7
      %v2529 = vsub.s32 0, %v2528
      %v2530 = vrot.slane %v2490, %v2529
      %v2531 = vlaneseq
      %v2532 = vshrl.u32 %v2531, 7
      %v2533 = vsub.s32 0, %v2532
      %v2534 = vrot.slane %v2504, %v2533
      %v2535 = vlaneseq
      %v2536 = vshrl.u32 %v2535, 7
      %v2537 = vsub.s32 0, %v2536
      %v2538 = vrot.slane %v2506, %v2537
      %v2546 = vmul.f32 %v2514, %v2509
      %v2547 = vmul.f32 %v2514, %v2510
      %v2548 = vmul.f32 %v2518, %v2509
      %v2549 = vmul.f32 %v2518, %v2510
      %v2550 = vmul.f32 %v2522, %v2509
      %v2551 = vmul.f32 %v2522, %v2510
      %v2552 = vmul.f32 %v2526, %v2509
      %v2553 = vmul.f32 %v2526, %v2510
      %v2554 = vmul.f32 %v2530, %v2509
      %v2555 = vmul.f32 %v2530, %v2510
      %v2556 = vmul.f32 %v2534, %v2509
      %v2557 = vmul.f32 %v2534, %v2510
      %v2558 = vmul.f32 %v2538, %v2509
      %v2559 = vmul.f32 %v2538, %v2510
      %v2560 = vadd.f32 %v2442, %v2546
      %v2561 = vadd.f32 %v2443, %v2547
      %v2562 = vadd.f32 %v2444, %v2548
      %v2563 = vadd.f32 %v2445, %v2549
      %v2564 = vadd.f32 %v2446, %v2550
      %v2565 = vadd.f32 %v2447, %v2551
      %v2566 = vadd.f32 %v2448, %v2552
      %v2567 = vadd.f32 %v2449, %v2553
      %v2568 = vadd.f32 %v2450, %v2554
      %v2569 = vadd.f32 %v2451, %v2555
      %v2570 = vadd.f32 %v2452, %v2556
      %v2571 = vadd.f32 %v2453, %v2557
      %v2572 = vadd.f32 %v2454, %v2558
      %v2573 = vadd.f32 %v2455, %v2559
      %v2574 = vld [vmem:[%s7] sm:$0xff]
      %v2575 = vld [vmem:[%s7 + $0x8] sm:$0xff]
      %v2576 = vld [vmem:[%s7 + $0x10] sm:$0xff]
      %v2577 = vld [vmem:[%s7 + $0x18] sm:$0xff]
      %vm2578 = vcmask 916480
      %v2580 = vsel %vm2578, %v2574, 0
      %v2583 = vsel %vm2578, %v2575, 0
      %v2586 = vsel %vm2578, %v2576, 0
      %v2589 = vsel %vm2578, %v2577, 0
      %2591 = vmatprep.subr.mxu0 0.0
      %2592 = vmatpush1.msra.mxu0 0.0
      %2593 = vmatprep.subr.mxu0 0.0
      %2594 = vmatpush1.msra.mxu0 0.0
      %2595 = vmatprep.subr.mxu0 0.0
      %2596 = vmatpush1.msra.mxu0 %v2573
      %2597 = vmatprep.subr.mxu0 0.0
      %2598 = vmatpush1.msra.mxu0 %v2572
      %2599 = vmatprep.subr.mxu0 0.0
      %2600 = vmatpush1.msra.mxu0 %v2571
      %2601 = vmatprep.subr.mxu0 0.0
      %2602 = vmatpush1.msra.mxu0 %v2570
      %2603 = vmatprep.subr.mxu0 0.0
      %2604 = vmatpush1.msra.mxu0 %v2569
      %2605 = vmatprep.subr.mxu0 0.0
      %2606 = vmatpush1.msra.mxu0 %v2568
      %2607 = vmatprep.subr.mxu0 0.0
      %2608 = vmatpush1.msra.mxu0 %v2567
      %2609 = vmatprep.subr.mxu0 0.0
      %2610 = vmatpush1.msra.mxu0 %v2566
      %2611 = vmatprep.subr.mxu0 0.0
      %2612 = vmatpush1.msra.mxu0 %v2565
      %2613 = vmatprep.subr.mxu0 0.0
      %2614 = vmatpush1.msra.mxu0 %v2564
      %2615 = vmatprep.subr.mxu0 0.0
      %2616 = vmatpush1.msra.mxu0 %v2563
      %2617 = vmatprep.subr.mxu0 0.0
      %2618 = vmatpush1.msra.mxu0 %v2562
      %2619 = vmatprep.subr.mxu0 0.0
      %2620 = vmatpush1.msra.mxu0 %v2561
      %2621 = vmatprep.subr.mxu0 0.0
      %2622 = vmatpush1.msra.mxu0 %v2560
      %2623 = vmatprep.subr.mxu0 0.0
      %2624 = vmatpush2.msra.mxu0 0.0
      %2625 = vmatprep.subr.mxu0 0.0
      %2626 = vmatpush2.msra.mxu0 0.0
      %2627 = vmatprep.subr.mxu0 0.0
      %2628 = vmatpush2.msra.mxu0 0.0
      %2629 = vmatprep.subr.mxu0 0.0
      %2630 = vmatpush2.msra.mxu0 0.0
      %2631 = vmatprep.subr.mxu0 0.0
      %2632 = vmatpush2.msra.mxu0 0.0
      %2633 = vmatprep.subr.mxu0 0.0
      %2634 = vmatpush2.msra.mxu0 0.0
      %2635 = vmatprep.subr.mxu0 0.0
      %2636 = vmatpush2.msra.mxu0 0.0
      %2637 = vmatprep.subr.mxu0 0.0
      %2638 = vmatpush2.msra.mxu0 0.0
      %2639 = vmatprep.subr.mxu0 0.0
      %2640 = vmatpush2.msra.mxu0 0.0
      %2641 = vmatprep.subr.mxu0 0.0
      %2642 = vmatpush2.msra.mxu0 0.0
      %2643 = vmatprep.subr.mxu0 0.0
      %2644 = vmatpush2.msra.mxu0 0.0
      %2645 = vmatprep.subr.mxu0 0.0
      %2646 = vmatpush2.msra.mxu0 0.0
      %2647 = vmatprep.subr.mxu0 0.0
      %2648 = vmatpush2.msra.mxu0 0.0
      %2649 = vmatprep.subr.mxu0 0.0
      %2650 = vmatpush2.msra.mxu0 0.0
      %2651 = vmatprep.subr.mxu0 0.0
      %2652 = vmatpush2.msra.mxu0 0.0
      %2653 = vmatprep.subr.mxu0 0.0
      %2654 = vmatpush2.msra.mxu0 0.0
      %2655 = vmatprep.mubr.f32.mxu0 0.0
      %2656 = vmatmul.mubr.f32.gmra.mxu0 %v2580
      %v2657 = vpop.f32.mrf.mxu0
      %v2658 = vadd.f32 0.0, %v2657
      %v2659 = vpop.f32.mrf.mxu0
      %2660 = vmatprep.mubr.f32.mxu0 0.0
      %2661 = vmatmul.mubr.f32.gmra.mxu0 %v2583
      %v2662 = vpop.f32.mrf.mxu0
      %v2663 = vadd.f32 0.0, %v2662
      %v2664 = vpop.f32.mrf.mxu0
      %2665 = vmatprep.mubr.f32.mxu0 0.0
      %2666 = vmatmul.mubr.f32.gmra.mxu0 %v2586
      %v2667 = vpop.f32.mrf.mxu0
      %v2668 = vadd.f32 0.0, %v2667
      %v2669 = vpop.f32.mrf.mxu0
      %2670 = vmatprep.mubr.f32.mxu0 0.0
      %2671 = vmatmul.mubr.f32.gmra.mxu0 %v2589
      %v2672 = vpop.f32.mrf.mxu0
      %v2673 = vadd.f32 0.0, %v2672
      %v2674 = vpop.f32.mrf.mxu0
      %2675 = vdwg.mxu0
      %v2676 = vadd.f32 %v1615, %v2658
      %v2677 = vadd.f32 %v1620, %v2663
      %v2678 = vadd.f32 %v1625, %v2668
      %v2679 = vadd.f32 %v1630, %v2673
      %vm2680 = vcmp.gt.f32.partialorder %v2676, 0.0
      %vm2681 = vcmp.gt.f32.partialorder %v2677, 0.0
      %vm2682 = vcmp.gt.f32.partialorder %v2678, 0.0
      %vm2683 = vcmp.gt.f32.partialorder %v2679, 0.0
      %v2684 = vmul.f32 %v2676, 0.1
      %v2685 = vmul.f32 %v2677, 0.1
      %v2686 = vmul.f32 %v2678, 0.1
      %v2687 = vmul.f32 %v2679, 0.1
      %v2688 = vsel %vm2680, %v2676, %v2684
      %v2689 = vsel %vm2681, %v2677, %v2685
      %v2690 = vsel %vm2682, %v2678, %v2686
      %v2691 = vsel %vm2683, %v2679, %v2687
      %2692 = vst [vmem:[%s363] sm:$0xff] %v2688
      %2693 = vst [vmem:[%s363 + $0x8] sm:$0xff] %v2689
      %2694 = vst [vmem:[%s363 + $0x10] sm:$0xff] %v2690
      %2695 = vst [vmem:[%s363 + $0x18] sm:$0xff] %v2691
      %p2696 = scmp.lt.s32.totalorder %s24, 1
      %s2697 = scalar_select %p2696, %s24, 1
      %p2698 = scmp.lt.s32.totalorder %s25, 0
      %s2699 = scalar_select %p2698, %s25, 0
      %s2700 = smul.addr %s2697, 4
      %s2701 = sadd.s32 %s2699, %s2700
      %s2702 = smul.addr %s2701, 8
      %s2703 = scalar_lea.vmem %s9, %s2702
      // Predicated region
      $region57: #{pointconvd_forward.1} parent=55 // pred_check
        %p2704 = pneg %p248
      $region58: #{pointconvd_forward.1} parent=55 // pred_check_branch
        %2706 = sbr.rel (%p2704) target = $region60
      $region59: #{pointconvd_forward.1} parent=55 // pred_region
        _
      $region60: #{pointconvd_forward.1} parent=55 // pred_fallthru
        _
    $region56: #{pointconvd_forward.1} parent=5 // pred_fallthru
      _
    %p2707 = scmp.le.s32.totalorder 2, %s15
    // Predicated region
    $region61: #{pointconvd_forward.1} parent=5 // pred_check
      %p2708 = pneg %p2707
    $region62: #{pointconvd_forward.1} parent=5 // pred_check_branch
      %2710 = sbr.rel (%p2708) target = $region64
    $region63: #{pointconvd_forward.1} parent=5 // pred_region
      %s2711 = ssub.s32 %s15, 2
      // Predicated region
      $region65: #{pointconvd_forward.1} parent=63 // pred_check
        %p2712 = pneg %p254
      $region66: #{pointconvd_forward.1} parent=63 // pred_check_branch
        %2714 = sbr.rel (%p2712) target = $region68
      $region67: #{pointconvd_forward.1} parent=63 // pred_region
        %p2715 = scmp.lt.s32.totalorder %s26, 1
        %s2716 = scalar_select %p2715, %s26, 1
        %p2717 = scmp.lt.s32.totalorder %s27, 0
        %s2718 = scalar_select %p2717, %s27, 0
        %s2719 = smul.addr %s2716, 4
        %s2720 = sadd.s32 %s2718, %s2719
        %s2721 = smul.addr %s2720, 8
        %s2722 = scalar_lea.vmem %s9, %s2721
      $region68: #{pointconvd_forward.1} parent=63 // pred_fallthru
        _
    $region64: #{pointconvd_forward.1} parent=5 // pred_fallthru
      _
  $region6: #{pointconvd_forward.1} parent=0 // loop_footer
    %s19 = sadd.s32 1, %s15
  $region7: #{pointconvd_forward.1} parent=0 // loop_footer_branch
    %14 = sbr.rel target = $region3
  $region8: #{pointconvd_forward.1} parent=0 // loop_exit
    _

</llo_original>
